<compile_context>
chip_gen: v6e
topology: v6e:2x2x1
jax: 0.10.0
libtpu: 0.0.40
codegen_flags: <defaults>
</compile_context>

<pallas_src>
import functools

import jax
import jax.numpy as jnp
from jax.experimental import pallas as pl
from jax.experimental.pallas import tpu as pltpu

KSIZE = 7
PAD = KSIZE // 2


def _roll_lanes(x, d):
    """result[..., j] = x[..., (j + d) % n]  -- static lane rotation.

    Guaranteed-direction lane rotate (equivalent role to pltpu.roll): lowers to
    an XLU-side rotation of in-register data, keeping the dx shifts off the
    vld/VALU slots that the big elementwise streams occupy.
    """
    n = x.shape[-1]
    d = d % n
    if d == 0:
        return x
    return jnp.concatenate([x[..., d:], x[..., :d]], axis=-1)


def cbam_kernel(x_ref, w1t_ref, w2t_ref, wsp_ref, mask_ref, o_ref, spad_ref,
                *, W, pad_l, c_chunk):
    # x_ref block: (Nb, C, HW) -- lane-dense flattened spatial axis.
    Nb, C, HW = x_ref.shape

    # ---------------- Channel attention ----------------
    # AdaptiveAvgPool2d(1) / AdaptiveMaxPool2d(1): lane-axis reduces done in
    # channel chunks so no full-block f32 temporary is ever kept live.
    sums, maxs = [], []
    for c0 in range(0, C, c_chunk):
        c1 = min(c0 + c_chunk, C)
        xc = x_ref[:, c0:c1, :].astype(jnp.float32)            # (Nb, cc, HW)
        sums.append(jnp.sum(xc, axis=-1))
        maxs.append(jnp.max(xc, axis=-1))
    avg = jnp.concatenate(sums, axis=1) * (1.0 / HW)           # (Nb, C)
    mx = jnp.concatenate(maxs, axis=1)                         # (Nb, C)

    # Fused FC: avg rows and max rows of the whole block share one matmul pair.
    v = jnp.concatenate([avg, mx], axis=0)                     # (2*Nb, C)
    h = jnp.maximum(
        jnp.dot(v, w1t_ref[...], preferred_element_type=jnp.float32), 0.0)
    f = jnp.dot(h, w2t_ref[...], preferred_element_type=jnp.float32)
    ca = jax.nn.sigmoid(f[:Nb] + f[Nb:])                       # (Nb, C)

    # ------- Apply channel attention + spatial pooling in one chunked pass ---
    # The CA product is staged directly into o_ref (no `out1` temporary) while
    # the running channel-sum / channel-max feed the spatial attention.
    run_sum = jnp.zeros((Nb, HW), jnp.float32)
    run_max = jnp.full((Nb, HW), -jnp.inf, jnp.float32)
    for c0 in range(0, C, c_chunk):
        c1 = min(c0 + c_chunk, C)
        prod = x_ref[:, c0:c1, :].astype(jnp.float32) * ca[:, c0:c1, None]
        o_ref[:, c0:c1, :] = prod.astype(o_ref.dtype)
        run_sum = run_sum + jnp.sum(prod, axis=1)
        run_max = jnp.maximum(run_max, jnp.max(prod, axis=1))
    avg_sp = run_sum * (1.0 / C)                               # (Nb, HW)
    max_sp = run_max                                           # (Nb, HW)

    # One dense store of the zero-padded 2-channel map.  pad_l is a multiple
    # of 128, so the payload sits at an aligned lane offset within the frame.
    total = spad_ref.shape[-1]
    pad_r = total - pad_l - HW
    sp = jnp.concatenate([avg_sp[:, None, :], max_sp[:, None, :]], axis=1)
    spad_ref[...] = jnp.concatenate(
        [jnp.zeros((Nb, 2, pad_l), jnp.float32), sp,
         jnp.zeros((Nb, 2, pad_r), jnp.float32)], axis=-1)

    # ---------------- 7x7 spatial conv ----------------
    # 14 base lane-slices per sample (one per (channel, dy)); the 7 dx shifts
    # are lane rotations of the per-dx weighted sum.  The per-dx column mask
    # (applied after the dx-group accumulation) zeroes exactly the lanes that
    # wrap across rows, so this matches SAME zero-padding.
    sa_rows = []
    for n in range(Nb):                       # per-sample: accumulators stay small
        bases = []
        for c in range(2):
            for dy in range(KSIZE):
                off = pad_l + (dy - PAD) * W                   # static offset
                bases.append(spad_ref[n:n + 1, c, off:off + HW])   # (1, HW)
        acc = None
        for dx in range(KSIZE):
            part = None
            for c in range(2):
                for dy in range(KSIZE):
                    wval = wsp_ref[c * KSIZE * KSIZE + dy * KSIZE + dx]  # SMEM
                    tap = wval * bases[c * KSIZE + dy]
                    part = tap if part is None else part + tap
            part = _roll_lanes(part, dx - PAD)
            if dx != PAD:                     # centre column: mask is all ones
                part = part * mask_ref[dx:dx + 1, :]
            acc = part if acc is None else acc + part
        sa_rows.append(jax.nn.sigmoid(acc))                    # (1, HW)
    sa = jnp.concatenate(sa_rows, axis=0)                      # (Nb, HW)

    # ------------- Final rescale: chunked read-modify-write of o_ref ---------
    for c0 in range(0, C, c_chunk):
        c1 = min(c0 + c_chunk, C)
        blk = o_ref[:, c0:c1, :].astype(jnp.float32)
        o_ref[:, c0:c1, :] = (blk * sa[:, None, :]).astype(o_ref.dtype)


def _round_up(x, m):
    return -(-x // m) * m


def cbam(x, w1, w2, w_spatial, block_n=None):
    """x: (N, C, H, W); w1: (C//r, C); w2: (C, C//r); w_spatial: (1, 2, 7, 7)."""
    N, C, H, W = x.shape
    HW = H * W
    Cr = w1.shape[0]
    itemsize = jnp.dtype(x.dtype).itemsize

    # Flat zero padding covering the most negative 7x7 tap offset; left pad is
    # rounded up to a 128-lane multiple so the payload store is lane-aligned.
    padf = PAD * W + PAD
    pad_l = _round_up(padf, 128)
    pad_r = _round_up(padf, 128)
    total_pad = pad_l + HW + pad_r

    # ---- VMEM-aware block sizing (v7x: 64 MiB physical; 16/32 MiB default
    # scoped limit on v5e / v6e+v7x). ----
    CHUNK_BYTES = 2 << 20
    VMEM_BUDGET = 40 << 20            # leaves headroom inside v7x's 64 MiB

    def vmem_estimate(b):
        io = b * C * HW * itemsize
        est = 2 * 2 * io                                 # dbl-buffered in+out
        est += b * 2 * total_pad * 4                     # padded spatial scratch
        est += min(b * C * HW * 4, CHUNK_BYTES)          # live f32 channel chunk
        est += 8 * b * HW * 4                            # pooled maps / acc / sa
        est += 2 * (KSIZE * HW + 2 * C * Cr + 2 * KSIZE * KSIZE) * 4  # consts
        return est

    if block_n is None:
        # Largest block (capped to bound static unroll of the per-sample conv)
        # whose pipelined footprint fits the VMEM budget.
        block_n = 1
        for b in range(min(N, 8), 0, -1):
            if vmem_estimate(b) <= VMEM_BUDGET:
                block_n = b
                break
        # Keep >= 2 grid steps when N > 1 so both v7x TensorCores get work
        # (harmless on single-TC v5e/v6e).
        if N > 1 and -(-N // block_n) < 2:
            block_n = -(-N // 2)
    block_n = max(1, min(int(block_n), N))

    # Pad the batch so odd/prime N still runs with large blocks.
    Np = _round_up(N, block_n)
    xf = x.reshape(N, C, HW)                              # free in XLA
    if Np != N:
        xf = jnp.pad(xf, ((0, Np - N), (0, 0), (0, 0)))

    # Channel-chunk size for the in-kernel passes (bounds the live f32 working
    # set); keep it a sublane multiple when possible.
    c_chunk = C
    while c_chunk > 8 and block_n * c_chunk * HW * 4 > CHUNK_BYTES:
        c_chunk = (c_chunk + 1) // 2
    if C >= 8:
        c_chunk = max(8, (c_chunk // 8) * 8)

    w1t = jnp.asarray(w1, jnp.float32).T                      # (C, Cr)
    w2t = jnp.asarray(w2, jnp.float32).T                      # (Cr, C)
    wsp_flat = jnp.asarray(w_spatial, jnp.float32).reshape(-1)  # (2*K*K,)

    # Per-dx column-validity masks (host-side); they also zero exactly the
    # lanes that wrap around in the in-kernel lane rotation.
    col = jnp.arange(HW, dtype=jnp.int32) % W
    col_masks = jnp.stack(
        [((col + (dx - PAD) >= 0) & (col + (dx - PAD) < W)) for dx in range(KSIZE)],
        axis=0).astype(jnp.float32)                           # (KSIZE, HW)

    grid = (Np // block_n,)
    kernel = functools.partial(cbam_kernel, W=W, pad_l=pad_l, c_chunk=c_chunk)

    vmem_limit = int(min(max(vmem_estimate(block_n) + (8 << 20), 32 << 20),
                         48 << 20))

    out_flat = pl.pallas_call(
        kernel,
        out_shape=jax.ShapeDtypeStruct((Np, C, HW), x.dtype),
        grid_spec=pltpu.PrefetchScalarGridSpec(
            num_scalar_prefetch=0,
            grid=grid,
            in_specs=[
                pl.BlockSpec((block_n, C, HW), lambda n: (n, 0, 0)),
                pl.BlockSpec((C, Cr), lambda n: (0, 0)),
                pl.BlockSpec((Cr, C), lambda n: (0, 0)),
                pl.BlockSpec(memory_space=pltpu.MemorySpace.SMEM),
                pl.BlockSpec((KSIZE, HW), lambda n: (0, 0)),
            ],
            out_specs=pl.BlockSpec((block_n, C, HW), lambda n: (n, 0, 0)),
            scratch_shapes=[
                pltpu.VMEM((block_n, 2, total_pad), jnp.float32),
            ],
        ),
        compiler_params=pltpu.CompilerParams(
            dimension_semantics=("parallel",),
            vmem_limit_bytes=vmem_limit),
    )(xf, w1t, w2t, wsp_flat, col_masks)

    return out_flat[:N].reshape(N, C, H, W)


def cbam_ref(x, w1, w2, w_spatial):
    """Pure-JAX reference matching the PyTorch CBAM forward."""
    avg = jnp.mean(x, axis=(2, 3), keepdims=True)             # (N, C, 1, 1)
    mx = jnp.max(x, axis=(2, 3), keepdims=True)

    def fc(v):
        v2 = v[:, :, 0, 0]                                    # (N, C)
        h = jax.nn.relu(v2 @ w1.T)                            # (N, Cr)
        return (h @ w2.T)[:, :, None, None]                   # (N, C, 1, 1)

    ca = jax.nn.sigmoid(fc(avg) + fc(mx))
    out = ca * x

    avg_s = jnp.mean(out, axis=1, keepdims=True)
    max_s = jnp.max(out, axis=1, keepdims=True)
    cat = jnp.concatenate([avg_s, max_s], axis=1)             # (N, 2, H, W)
    conv = jax.lax.conv_general_dilated(
        cat, w_spatial, window_strides=(1, 1),
        padding=((PAD, PAD), (PAD, PAD)),
        dimension_numbers=("NCHW", "OIHW", "NCHW"))
    sa = jax.nn.sigmoid(conv)
    return sa * out


if __name__ == "__main__":
    # channel=32 so that channel // ratio(=16) = 2 (PyTorch __init__ constraint).
    N, C, H, W = 2, 32, 16, 16
    ratio = 16
    Cr = C // ratio

    key = jax.random.PRNGKey(0)
    k1, k2, k3, k4 = jax.random.split(key, 4)
    x = jax.random.normal(k1, (N, C, H, W), jnp.float32)
    w1 = jax.random.normal(k2, (Cr, C), jnp.float32) * 0.2        # Conv2d(C, C//16, 1)
    w2 = jax.random.normal(k3, (C, Cr), jnp.float32) * 0.2        # Conv2d(C//16, C, 1)
    w_spatial = jax.random.normal(k4, (1, 2, KSIZE, KSIZE), jnp.float32) * 0.1

    out = cbam(x, w1, w2, w_spatial)
    out = jax.block_until_ready(out)

    ref = cbam_ref(x, w1, w2, w_spatial)
    assert out.shape == (N, C, H, W)
    assert jnp.allclose(out, ref, atol=1e-4, rtol=1e-4), \
        float(jnp.max(jnp.abs(out - ref)))
    print("KERNEL_OK")
</pallas_src>

<mosaic_0001>
module attributes {stable_mosaic.version = 11 : i64} {
  func.func @cbam_kernel(%arg0: i32, %arg1: memref<1x32x256xf32, #tpu.memory_space<vmem>>, %arg2: memref<32x2xf32, #tpu.memory_space<vmem>>, %arg3: memref<2x32xf32, #tpu.memory_space<vmem>>, %arg4: memref<98xf32, #tpu.memory_space<smem>>, %arg5: memref<7x256xf32, #tpu.memory_space<vmem>>, %arg6: memref<1x32x256xf32, #tpu.memory_space<vmem>>, %arg7: memref<1x2x512xf32, #tpu.memory_space<vmem>>) attributes {dimension_semantics = [#tpu.dimension_semantics<parallel>], iteration_bounds = array<i64: 2>, scalar_prefetch = 0 : i64, scratch_operands = 1 : i64, tpu.core_type = #tpu.core_type<tc>, window_params = [{transform_indices = @transform_0, window_bounds = array<i64: 1, 32, 256>}, {pipeline_mode = #tpu.pipeline_mode<synchronous>, transform_indices = @transform_1, window_bounds = array<i64: 32, 2>}, {pipeline_mode = #tpu.pipeline_mode<synchronous>, transform_indices = @transform_2, window_bounds = array<i64: 2, 32>}, {transform_indices = @transform_3, window_bounds = array<i64: 98>}, {pipeline_mode = #tpu.pipeline_mode<synchronous>, transform_indices = @transform_4, window_bounds = array<i64: 7, 256>}, {transform_indices = @transform_5, window_bounds = array<i64: 1, 32, 256>}]} {
    %c0 = arith.constant 0 : index
    %c0_0 = arith.constant 0 : index
    %c0_1 = arith.constant 0 : index
    %0 = vector.load %arg1[%c0, %c0_0, %c0_1] : memref<1x32x256xf32, #tpu.memory_space<vmem>>, vector<1x32x256xf32>
    %cst = arith.constant dense<0.000000e+00> : vector<1x32xf32>
    %1 = vector.multi_reduction <add>, %0, %cst [2] : vector<1x32x256xf32> to vector<1x32xf32>
    %cst_2 = arith.constant dense<0xFF800000> : vector<1x32xf32>
    %2 = vector.multi_reduction <maximumf>, %0, %cst_2 [2] : vector<1x32x256xf32> to vector<1x32xf32>
    %cst_3 = arith.constant 3.906250e-03 : f32
    %3 = vector.broadcast %cst_3 : f32 to vector<1x32xf32>
    %4 = arith.mulf %1, %3 : vector<1x32xf32>
    %5 = tpu.concatenate %4, %2 in 0 : vector<1x32xf32>, vector<1x32xf32> -> vector<2x32xf32>
    %c0_4 = arith.constant 0 : index
    %c0_5 = arith.constant 0 : index
    %6 = vector.load %arg2[%c0_4, %c0_5] : memref<32x2xf32, #tpu.memory_space<vmem>>, vector<32x2xf32>
    %cst_6 = arith.constant dense<0.000000e+00> : vector<2x2xf32>
    %7 = tpu.matmul %5, %6, %cst_6 {dimension_numbers = #tpu.dot_dimension_numbers<[1], [0], [0], [1], [0, 0, 1, 1], [], []>} : vector<2x32xf32>, vector<32x2xf32>, vector<2x2xf32> -> vector<2x2xf32>
    %cst_7 = arith.constant 0.000000e+00 : f32
    %8 = vector.broadcast %cst_7 : f32 to vector<2x2xf32>
    %9 = arith.maximumf %7, %8 : vector<2x2xf32>
    %c0_8 = arith.constant 0 : index
    %c0_9 = arith.constant 0 : index
    %10 = vector.load %arg3[%c0_8, %c0_9] : memref<2x32xf32, #tpu.memory_space<vmem>>, vector<2x32xf32>
    %cst_10 = arith.constant dense<0.000000e+00> : vector<2x32xf32>
    %11 = tpu.matmul %9, %10, %cst_10 {dimension_numbers = #tpu.dot_dimension_numbers<[1], [0], [0], [1], [0, 0, 1, 1], [], []>} : vector<2x2xf32>, vector<2x32xf32>, vector<2x32xf32> -> vector<2x32xf32>
    %12 = vector.extract_strided_slice %11 {offsets = [0, 0], sizes = [1, 32], strides = [1, 1]} : vector<2x32xf32> to vector<1x32xf32>
    %13 = vector.extract_strided_slice %11 {offsets = [1, 0], sizes = [1, 32], strides = [1, 1]} : vector<2x32xf32> to vector<1x32xf32>
    %14 = arith.addf %12, %13 : vector<1x32xf32>
    %15 = arith.negf %14 : vector<1x32xf32>
    %16 = math.exp %15 : vector<1x32xf32>
    %cst_11 = arith.constant 1.000000e+00 : f32
    %17 = vector.broadcast %cst_11 : f32 to vector<1x32xf32>
    %18 = arith.addf %17, %16 : vector<1x32xf32>
    %19 = arith.divf %17, %18 : vector<1x32xf32>
    %cst_12 = arith.constant 0.000000e+00 : f32
    %20 = vector.broadcast %cst_12 : f32 to vector<1x256xf32>
    %cst_13 = arith.constant 0xFF800000 : f32
    %21 = vector.broadcast %cst_13 : f32 to vector<1x256xf32>
    %c0_14 = arith.constant 0 : index
    %c0_15 = arith.constant 0 : index
    %c0_16 = arith.constant 0 : index
    %22 = vector.load %arg1[%c0_14, %c0_15, %c0_16] : memref<1x32x256xf32, #tpu.memory_space<vmem>>, vector<1x32x256xf32>
    %23 = vector.shape_cast %19 : vector<1x32xf32> to vector<1x32x1xf32>
    %24 = vector.broadcast %23 : vector<1x32x1xf32> to vector<1x32x256xf32>
    %25 = arith.mulf %22, %24 : vector<1x32x256xf32>
    %c0_17 = arith.constant 0 : index
    %c0_18 = arith.constant 0 : index
    %c0_19 = arith.constant 0 : index
    %26 = vector.load %arg6[%c0_17, %c0_18, %c0_19] : memref<1x32x256xf32, #tpu.memory_space<vmem>>, vector<1x32x256xf32>
    tpu.vector_store %arg6[%c0_17, %c0_18, %c0_19], %25 {strides = array<i32>} : memref<1x32x256xf32, #tpu.memory_space<vmem>>, vector<1x32x256xf32>,
    %cst_20 = arith.constant dense<0.000000e+00> : vector<1x256xf32>
    %27 = vector.multi_reduction <add>, %25, %cst_20 [1] : vector<1x32x256xf32> to vector<1x256xf32>
    %28 = arith.addf %20, %27 : vector<1x256xf32>
    %cst_21 = arith.constant dense<0xFF800000> : vector<1x256xf32>
    %29 = vector.multi_reduction <maximumf>, %25, %cst_21 [1] : vector<1x32x256xf32> to vector<1x256xf32>
    %30 = arith.maximumf %21, %29 : vector<1x256xf32>
    %cst_22 = arith.constant 3.125000e-02 : f32
    %31 = vector.broadcast %cst_22 : f32 to vector<1x256xf32>
    %32 = arith.mulf %28, %31 : vector<1x256xf32>
    %33 = vector.shape_cast %32 : vector<1x256xf32> to vector<1x1x256xf32>
    %34 = vector.shape_cast %30 : vector<1x256xf32> to vector<1x1x256xf32>
    %35 = tpu.concatenate %33, %34 in 1 : vector<1x1x256xf32>, vector<1x1x256xf32> -> vector<1x2x256xf32>
    %cst_23 = arith.constant 0.000000e+00 : f32
    %36 = vector.broadcast %cst_23 : f32 to vector<1x2x128xf32>
    %cst_24 = arith.constant 0.000000e+00 : f32
    %37 = vector.broadcast %cst_24 : f32 to vector<1x2x128xf32>
    %38 = tpu.concatenate %36, %35, %37 in 2 : vector<1x2x128xf32>, vector<1x2x256xf32>, vector<1x2x128xf32> -> vector<1x2x512xf32>
    %c0_25 = arith.constant 0 : index
    %c0_26 = arith.constant 0 : index
    %c0_27 = arith.constant 0 : index
    %39 = vector.load %arg7[%c0_25, %c0_26, %c0_27] : memref<1x2x512xf32, #tpu.memory_space<vmem>>, vector<1x2x512xf32>
    tpu.vector_store %arg7[%c0_25, %c0_26, %c0_27], %38 {strides = array<i32>} : memref<1x2x512xf32, #tpu.memory_space<vmem>>, vector<1x2x512xf32>,
    %c0_28 = arith.constant 0 : index
    %c0_29 = arith.constant 0 : index
    %c80 = arith.constant 80 : index
    %40 = vector.load %arg7[%c0_28, %c0_29, %c80] : memref<1x2x512xf32, #tpu.memory_space<vmem>>, vector<1x1x256xf32>
    %41 = vector.shape_cast %40 : vector<1x1x256xf32> to vector<1x256xf32>
    %c0_30 = arith.constant 0 : index
    %c0_31 = arith.constant 0 : index
    %c96 = arith.constant 96 : index
    %42 = vector.load %arg7[%c0_30, %c0_31, %c96] : memref<1x2x512xf32, #tpu.memory_space<vmem>>, vector<1x1x256xf32>
    %43 = vector.shape_cast %42 : vector<1x1x256xf32> to vector<1x256xf32>
    %c0_32 = arith.constant 0 : index
    %c0_33 = arith.constant 0 : index
    %c112 = arith.constant 112 : index
    %44 = vector.load %arg7[%c0_32, %c0_33, %c112] : memref<1x2x512xf32, #tpu.memory_space<vmem>>, vector<1x1x256xf32>
    %45 = vector.shape_cast %44 : vector<1x1x256xf32> to vector<1x256xf32>
    %c0_34 = arith.constant 0 : index
    %c0_35 = arith.constant 0 : index
    %c128 = arith.constant 128 : index
    %46 = vector.load %arg7[%c0_34, %c0_35, %c128] : memref<1x2x512xf32, #tpu.memory_space<vmem>>, vector<1x1x256xf32>
    %47 = vector.shape_cast %46 : vector<1x1x256xf32> to vector<1x256xf32>
    %c0_36 = arith.constant 0 : index
    %c0_37 = arith.constant 0 : index
    %c144 = arith.constant 144 : index
    %48 = vector.load %arg7[%c0_36, %c0_37, %c144] : memref<1x2x512xf32, #tpu.memory_space<vmem>>, vector<1x1x256xf32>
    %49 = vector.shape_cast %48 : vector<1x1x256xf32> to vector<1x256xf32>
    %c0_38 = arith.constant 0 : index
    %c0_39 = arith.constant 0 : index
    %c160 = arith.constant 160 : index
    %50 = vector.load %arg7[%c0_38, %c0_39, %c160] : memref<1x2x512xf32, #tpu.memory_space<vmem>>, vector<1x1x256xf32>
    %51 = vector.shape_cast %50 : vector<1x1x256xf32> to vector<1x256xf32>
    %c0_40 = arith.constant 0 : index
    %c0_41 = arith.constant 0 : index
    %c176 = arith.constant 176 : index
    %52 = vector.load %arg7[%c0_40, %c0_41, %c176] : memref<1x2x512xf32, #tpu.memory_space<vmem>>, vector<1x1x256xf32>
    %53 = vector.shape_cast %52 : vector<1x1x256xf32> to vector<1x256xf32>
    %c0_42 = arith.constant 0 : index
    %c1 = arith.constant 1 : index
    %c80_43 = arith.constant 80 : index
    %54 = vector.load %arg7[%c0_42, %c1, %c80_43] : memref<1x2x512xf32, #tpu.memory_space<vmem>>, vector<1x1x256xf32>
    %55 = vector.shape_cast %54 : vector<1x1x256xf32> to vector<1x256xf32>
    %c0_44 = arith.constant 0 : index
    %c1_45 = arith.constant 1 : index
    %c96_46 = arith.constant 96 : index
    %56 = vector.load %arg7[%c0_44, %c1_45, %c96_46] : memref<1x2x512xf32, #tpu.memory_space<vmem>>, vector<1x1x256xf32>
    %57 = vector.shape_cast %56 : vector<1x1x256xf32> to vector<1x256xf32>
    %c0_47 = arith.constant 0 : index
    %c1_48 = arith.constant 1 : index
    %c112_49 = arith.constant 112 : index
    %58 = vector.load %arg7[%c0_47, %c1_48, %c112_49] : memref<1x2x512xf32, #tpu.memory_space<vmem>>, vector<1x1x256xf32>
    %59 = vector.shape_cast %58 : vector<1x1x256xf32> to vector<1x256xf32>
    %c0_50 = arith.constant 0 : index
    %c1_51 = arith.constant 1 : index
    %c128_52 = arith.constant 128 : index
    %60 = vector.load %arg7[%c0_50, %c1_51, %c128_52] : memref<1x2x512xf32, #tpu.memory_space<vmem>>, vector<1x1x256xf32>
    %61 = vector.shape_cast %60 : vector<1x1x256xf32> to vector<1x256xf32>
    %c0_53 = arith.constant 0 : index
    %c1_54 = arith.constant 1 : index
    %c144_55 = arith.constant 144 : index
    %62 = vector.load %arg7[%c0_53, %c1_54, %c144_55] : memref<1x2x512xf32, #tpu.memory_space<vmem>>, vector<1x1x256xf32>
    %63 = vector.shape_cast %62 : vector<1x1x256xf32> to vector<1x256xf32>
    %c0_56 = arith.constant 0 : index
    %c1_57 = arith.constant 1 : index
    %c160_58 = arith.constant 160 : index
    %64 = vector.load %arg7[%c0_56, %c1_57, %c160_58] : memref<1x2x512xf32, #tpu.memory_space<vmem>>, vector<1x1x256xf32>
    %65 = vector.shape_cast %64 : vector<1x1x256xf32> to vector<1x256xf32>
    %c0_59 = arith.constant 0 : index
    %c1_60 = arith.constant 1 : index
    %c176_61 = arith.constant 176 : index
    %66 = vector.load %arg7[%c0_59, %c1_60, %c176_61] : memref<1x2x512xf32, #tpu.memory_space<vmem>>, vector<1x1x256xf32>
    %67 = vector.shape_cast %66 : vector<1x1x256xf32> to vector<1x256xf32>
    %c0_62 = arith.constant 0 : index
    %68 = memref.load %arg4[%c0_62] : memref<98xf32, #tpu.memory_space<smem>>
    %69 = vector.broadcast %68 : f32 to vector<1x256xf32>
    %70 = arith.mulf %69, %41 : vector<1x256xf32>
    %c7 = arith.constant 7 : index
    %71 = memref.load %arg4[%c7] : memref<98xf32, #tpu.memory_space<smem>>
    %72 = vector.broadcast %71 : f32 to vector<1x256xf32>
    %73 = arith.mulf %72, %43 : vector<1x256xf32>
    %74 = arith.addf %70, %73 : vector<1x256xf32>
    %c14 = arith.constant 14 : index
    %75 = memref.load %arg4[%c14] : memref<98xf32, #tpu.memory_space<smem>>
    %76 = vector.broadcast %75 : f32 to vector<1x256xf32>
    %77 = arith.mulf %76, %45 : vector<1x256xf32>
    %78 = arith.addf %74, %77 : vector<1x256xf32>
    %c21 = arith.constant 21 : index
    %79 = memref.load %arg4[%c21] : memref<98xf32, #tpu.memory_space<smem>>
    %80 = vector.broadcast %79 : f32 to vector<1x256xf32>
    %81 = arith.mulf %80, %47 : vector<1x256xf32>
    %82 = arith.addf %78, %81 : vector<1x256xf32>
    %c28 = arith.constant 28 : index
    %83 = memref.load %arg4[%c28] : memref<98xf32, #tpu.memory_space<smem>>
    %84 = vector.broadcast %83 : f32 to vector<1x256xf32>
    %85 = arith.mulf %84, %49 : vector<1x256xf32>
    %86 = arith.addf %82, %85 : vector<1x256xf32>
    %c35 = arith.constant 35 : index
    %87 = memref.load %arg4[%c35] : memref<98xf32, #tpu.memory_space<smem>>
    %88 = vector.broadcast %87 : f32 to vector<1x256xf32>
    %89 = arith.mulf %88, %51 : vector<1x256xf32>
    %90 = arith.addf %86, %89 : vector<1x256xf32>
    %c42 = arith.constant 42 : index
    %91 = memref.load %arg4[%c42] : memref<98xf32, #tpu.memory_space<smem>>
    %92 = vector.broadcast %91 : f32 to vector<1x256xf32>
    %93 = arith.mulf %92, %53 : vector<1x256xf32>
    %94 = arith.addf %90, %93 : vector<1x256xf32>
    %c49 = arith.constant 49 : index
    %95 = memref.load %arg4[%c49] : memref<98xf32, #tpu.memory_space<smem>>
    %96 = vector.broadcast %95 : f32 to vector<1x256xf32>
    %97 = arith.mulf %96, %55 : vector<1x256xf32>
    %98 = arith.addf %94, %97 : vector<1x256xf32>
    %c56 = arith.constant 56 : index
    %99 = memref.load %arg4[%c56] : memref<98xf32, #tpu.memory_space<smem>>
    %100 = vector.broadcast %99 : f32 to vector<1x256xf32>
    %101 = arith.mulf %100, %57 : vector<1x256xf32>
    %102 = arith.addf %98, %101 : vector<1x256xf32>
    %c63 = arith.constant 63 : index
    %103 = memref.load %arg4[%c63] : memref<98xf32, #tpu.memory_space<smem>>
    %104 = vector.broadcast %103 : f32 to vector<1x256xf32>
    %105 = arith.mulf %104, %59 : vector<1x256xf32>
    %106 = arith.addf %102, %105 : vector<1x256xf32>
    %c70 = arith.constant 70 : index
    %107 = memref.load %arg4[%c70] : memref<98xf32, #tpu.memory_space<smem>>
    %108 = vector.broadcast %107 : f32 to vector<1x256xf32>
    %109 = arith.mulf %108, %61 : vector<1x256xf32>
    %110 = arith.addf %106, %109 : vector<1x256xf32>
    %c77 = arith.constant 77 : index
    %111 = memref.load %arg4[%c77] : memref<98xf32, #tpu.memory_space<smem>>
    %112 = vector.broadcast %111 : f32 to vector<1x256xf32>
    %113 = arith.mulf %112, %63 : vector<1x256xf32>
    %114 = arith.addf %110, %113 : vector<1x256xf32>
    %c84 = arith.constant 84 : index
    %115 = memref.load %arg4[%c84] : memref<98xf32, #tpu.memory_space<smem>>
    %116 = vector.broadcast %115 : f32 to vector<1x256xf32>
    %117 = arith.mulf %116, %65 : vector<1x256xf32>
    %118 = arith.addf %114, %117 : vector<1x256xf32>
    %c91 = arith.constant 91 : index
    %119 = memref.load %arg4[%c91] : memref<98xf32, #tpu.memory_space<smem>>
    %120 = vector.broadcast %119 : f32 to vector<1x256xf32>
    %121 = arith.mulf %120, %67 : vector<1x256xf32>
    %122 = arith.addf %118, %121 : vector<1x256xf32>
    %123 = vector.extract_strided_slice %122 {offsets = [0, 253], sizes = [1, 3], strides = [1, 1]} : vector<1x256xf32> to vector<1x3xf32>
    %124 = vector.extract_strided_slice %122 {offsets = [0, 0], sizes = [1, 253], strides = [1, 1]} : vector<1x256xf32> to vector<1x253xf32>
    %125 = tpu.concatenate %123, %124 in 1 : vector<1x3xf32>, vector<1x253xf32> -> vector<1x256xf32>
    %c0_63 = arith.constant 0 : index
    %c0_64 = arith.constant 0 : index
    %126 = vector.load %arg5[%c0_63, %c0_64] : memref<7x256xf32, #tpu.memory_space<vmem>>, vector<1x256xf32>
    %127 = arith.mulf %125, %126 : vector<1x256xf32>
    %c1_65 = arith.constant 1 : index
    %128 = memref.load %arg4[%c1_65] : memref<98xf32, #tpu.memory_space<smem>>
    %129 = vector.broadcast %128 : f32 to vector<1x256xf32>
    %130 = arith.mulf %129, %41 : vector<1x256xf32>
    %c8 = arith.constant 8 : index
    %131 = memref.load %arg4[%c8] : memref<98xf32, #tpu.memory_space<smem>>
    %132 = vector.broadcast %131 : f32 to vector<1x256xf32>
    %133 = arith.mulf %132, %43 : vector<1x256xf32>
    %134 = arith.addf %130, %133 : vector<1x256xf32>
    %c15 = arith.constant 15 : index
    %135 = memref.load %arg4[%c15] : memref<98xf32, #tpu.memory_space<smem>>
    %136 = vector.broadcast %135 : f32 to vector<1x256xf32>
    %137 = arith.mulf %136, %45 : vector<1x256xf32>
    %138 = arith.addf %134, %137 : vector<1x256xf32>
    %c22 = arith.constant 22 : index
    %139 = memref.load %arg4[%c22] : memref<98xf32, #tpu.memory_space<smem>>
    %140 = vector.broadcast %139 : f32 to vector<1x256xf32>
    %141 = arith.mulf %140, %47 : vector<1x256xf32>
    %142 = arith.addf %138, %141 : vector<1x256xf32>
    %c29 = arith.constant 29 : index
    %143 = memref.load %arg4[%c29] : memref<98xf32, #tpu.memory_space<smem>>
    %144 = vector.broadcast %143 : f32 to vector<1x256xf32>
    %145 = arith.mulf %144, %49 : vector<1x256xf32>
    %146 = arith.addf %142, %145 : vector<1x256xf32>
    %c36 = arith.constant 36 : index
    %147 = memref.load %arg4[%c36] : memref<98xf32, #tpu.memory_space<smem>>
    %148 = vector.broadcast %147 : f32 to vector<1x256xf32>
    %149 = arith.mulf %148, %51 : vector<1x256xf32>
    %150 = arith.addf %146, %149 : vector<1x256xf32>
    %c43 = arith.constant 43 : index
    %151 = memref.load %arg4[%c43] : memref<98xf32, #tpu.memory_space<smem>>
    %152 = vector.broadcast %151 : f32 to vector<1x256xf32>
    %153 = arith.mulf %152, %53 : vector<1x256xf32>
    %154 = arith.addf %150, %153 : vector<1x256xf32>
    %c50 = arith.constant 50 : index
    %155 = memref.load %arg4[%c50] : memref<98xf32, #tpu.memory_space<smem>>
    %156 = vector.broadcast %155 : f32 to vector<1x256xf32>
    %157 = arith.mulf %156, %55 : vector<1x256xf32>
    %158 = arith.addf %154, %157 : vector<1x256xf32>
    %c57 = arith.constant 57 : index
    %159 = memref.load %arg4[%c57] : memref<98xf32, #tpu.memory_space<smem>>
    %160 = vector.broadcast %159 : f32 to vector<1x256xf32>
    %161 = arith.mulf %160, %57 : vector<1x256xf32>
    %162 = arith.addf %158, %161 : vector<1x256xf32>
    %c64 = arith.constant 64 : index
    %163 = memref.load %arg4[%c64] : memref<98xf32, #tpu.memory_space<smem>>
    %164 = vector.broadcast %163 : f32 to vector<1x256xf32>
    %165 = arith.mulf %164, %59 : vector<1x256xf32>
    %166 = arith.addf %162, %165 : vector<1x256xf32>
    %c71 = arith.constant 71 : index
    %167 = memref.load %arg4[%c71] : memref<98xf32, #tpu.memory_space<smem>>
    %168 = vector.broadcast %167 : f32 to vector<1x256xf32>
    %169 = arith.mulf %168, %61 : vector<1x256xf32>
    %170 = arith.addf %166, %169 : vector<1x256xf32>
    %c78 = arith.constant 78 : index
    %171 = memref.load %arg4[%c78] : memref<98xf32, #tpu.memory_space<smem>>
    %172 = vector.broadcast %171 : f32 to vector<1x256xf32>
    %173 = arith.mulf %172, %63 : vector<1x256xf32>
    %174 = arith.addf %170, %173 : vector<1x256xf32>
    %c85 = arith.constant 85 : index
    %175 = memref.load %arg4[%c85] : memref<98xf32, #tpu.memory_space<smem>>
    %176 = vector.broadcast %175 : f32 to vector<1x256xf32>
    %177 = arith.mulf %176, %65 : vector<1x256xf32>
    %178 = arith.addf %174, %177 : vector<1x256xf32>
    %c92 = arith.constant 92 : index
    %179 = memref.load %arg4[%c92] : memref<98xf32, #tpu.memory_space<smem>>
    %180 = vector.broadcast %179 : f32 to vector<1x256xf32>
    %181 = arith.mulf %180, %67 : vector<1x256xf32>
    %182 = arith.addf %178, %181 : vector<1x256xf32>
    %183 = vector.extract_strided_slice %182 {offsets = [0, 254], sizes = [1, 2], strides = [1, 1]} : vector<1x256xf32> to vector<1x2xf32>
    %184 = vector.extract_strided_slice %182 {offsets = [0, 0], sizes = [1, 254], strides = [1, 1]} : vector<1x256xf32> to vector<1x254xf32>
    %185 = tpu.concatenate %183, %184 in 1 : vector<1x2xf32>, vector<1x254xf32> -> vector<1x256xf32>
    %c1_66 = arith.constant 1 : index
    %c0_67 = arith.constant 0 : index
    %186 = vector.load %arg5[%c1_66, %c0_67] : memref<7x256xf32, #tpu.memory_space<vmem>>, vector<1x256xf32>
    %187 = arith.mulf %185, %186 : vector<1x256xf32>
    %188 = arith.addf %127, %187 : vector<1x256xf32>
    %c2 = arith.constant 2 : index
    %189 = memref.load %arg4[%c2] : memref<98xf32, #tpu.memory_space<smem>>
    %190 = vector.broadcast %189 : f32 to vector<1x256xf32>
    %191 = arith.mulf %190, %41 : vector<1x256xf32>
    %c9 = arith.constant 9 : index
    %192 = memref.load %arg4[%c9] : memref<98xf32, #tpu.memory_space<smem>>
    %193 = vector.broadcast %192 : f32 to vector<1x256xf32>
    %194 = arith.mulf %193, %43 : vector<1x256xf32>
    %195 = arith.addf %191, %194 : vector<1x256xf32>
    %c16 = arith.constant 16 : index
    %196 = memref.load %arg4[%c16] : memref<98xf32, #tpu.memory_space<smem>>
    %197 = vector.broadcast %196 : f32 to vector<1x256xf32>
    %198 = arith.mulf %197, %45 : vector<1x256xf32>
    %199 = arith.addf %195, %198 : vector<1x256xf32>
    %c23 = arith.constant 23 : index
    %200 = memref.load %arg4[%c23] : memref<98xf32, #tpu.memory_space<smem>>
    %201 = vector.broadcast %200 : f32 to vector<1x256xf32>
    %202 = arith.mulf %201, %47 : vector<1x256xf32>
    %203 = arith.addf %199, %202 : vector<1x256xf32>
    %c30 = arith.constant 30 : index
    %204 = memref.load %arg4[%c30] : memref<98xf32, #tpu.memory_space<smem>>
    %205 = vector.broadcast %204 : f32 to vector<1x256xf32>
    %206 = arith.mulf %205, %49 : vector<1x256xf32>
    %207 = arith.addf %203, %206 : vector<1x256xf32>
    %c37 = arith.constant 37 : index
    %208 = memref.load %arg4[%c37] : memref<98xf32, #tpu.memory_space<smem>>
    %209 = vector.broadcast %208 : f32 to vector<1x256xf32>
    %210 = arith.mulf %209, %51 : vector<1x256xf32>
    %211 = arith.addf %207, %210 : vector<1x256xf32>
    %c44 = arith.constant 44 : index
    %212 = memref.load %arg4[%c44] : memref<98xf32, #tpu.memory_space<smem>>
    %213 = vector.broadcast %212 : f32 to vector<1x256xf32>
    %214 = arith.mulf %213, %53 : vector<1x256xf32>
    %215 = arith.addf %211, %214 : vector<1x256xf32>
    %c51 = arith.constant 51 : index
    %216 = memref.load %arg4[%c51] : memref<98xf32, #tpu.memory_space<smem>>
    %217 = vector.broadcast %216 : f32 to vector<1x256xf32>
    %218 = arith.mulf %217, %55 : vector<1x256xf32>
    %219 = arith.addf %215, %218 : vector<1x256xf32>
    %c58 = arith.constant 58 : index
    %220 = memref.load %arg4[%c58] : memref<98xf32, #tpu.memory_space<smem>>
    %221 = vector.broadcast %220 : f32 to vector<1x256xf32>
    %222 = arith.mulf %221, %57 : vector<1x256xf32>
    %223 = arith.addf %219, %222 : vector<1x256xf32>
    %c65 = arith.constant 65 : index
    %224 = memref.load %arg4[%c65] : memref<98xf32, #tpu.memory_space<smem>>
    %225 = vector.broadcast %224 : f32 to vector<1x256xf32>
    %226 = arith.mulf %225, %59 : vector<1x256xf32>
    %227 = arith.addf %223, %226 : vector<1x256xf32>
    %c72 = arith.constant 72 : index
    %228 = memref.load %arg4[%c72] : memref<98xf32, #tpu.memory_space<smem>>
    %229 = vector.broadcast %228 : f32 to vector<1x256xf32>
    %230 = arith.mulf %229, %61 : vector<1x256xf32>
    %231 = arith.addf %227, %230 : vector<1x256xf32>
    %c79 = arith.constant 79 : index
    %232 = memref.load %arg4[%c79] : memref<98xf32, #tpu.memory_space<smem>>
    %233 = vector.broadcast %232 : f32 to vector<1x256xf32>
    %234 = arith.mulf %233, %63 : vector<1x256xf32>
    %235 = arith.addf %231, %234 : vector<1x256xf32>
    %c86 = arith.constant 86 : index
    %236 = memref.load %arg4[%c86] : memref<98xf32, #tpu.memory_space<smem>>
    %237 = vector.broadcast %236 : f32 to vector<1x256xf32>
    %238 = arith.mulf %237, %65 : vector<1x256xf32>
    %239 = arith.addf %235, %238 : vector<1x256xf32>
    %c93 = arith.constant 93 : index
    %240 = memref.load %arg4[%c93] : memref<98xf32, #tpu.memory_space<smem>>
    %241 = vector.broadcast %240 : f32 to vector<1x256xf32>
    %242 = arith.mulf %241, %67 : vector<1x256xf32>
    %243 = arith.addf %239, %242 : vector<1x256xf32>
    %244 = vector.extract_strided_slice %243 {offsets = [0, 255], sizes = [1, 1], strides = [1, 1]} : vector<1x256xf32> to vector<1x1xf32>
    %245 = vector.extract_strided_slice %243 {offsets = [0, 0], sizes = [1, 255], strides = [1, 1]} : vector<1x256xf32> to vector<1x255xf32>
    %246 = tpu.concatenate %244, %245 in 1 : vector<1x1xf32>, vector<1x255xf32> -> vector<1x256xf32>
    %c2_68 = arith.constant 2 : index
    %c0_69 = arith.constant 0 : index
    %247 = vector.load %arg5[%c2_68, %c0_69] : memref<7x256xf32, #tpu.memory_space<vmem>>, vector<1x256xf32>
    %248 = arith.mulf %246, %247 : vector<1x256xf32>
    %249 = arith.addf %188, %248 : vector<1x256xf32>
    %c3 = arith.constant 3 : index
    %250 = memref.load %arg4[%c3] : memref<98xf32, #tpu.memory_space<smem>>
    %251 = vector.broadcast %250 : f32 to vector<1x256xf32>
    %252 = arith.mulf %251, %41 : vector<1x256xf32>
    %c10 = arith.constant 10 : index
    %253 = memref.load %arg4[%c10] : memref<98xf32, #tpu.memory_space<smem>>
    %254 = vector.broadcast %253 : f32 to vector<1x256xf32>
    %255 = arith.mulf %254, %43 : vector<1x256xf32>
    %256 = arith.addf %252, %255 : vector<1x256xf32>
    %c17 = arith.constant 17 : index
    %257 = memref.load %arg4[%c17] : memref<98xf32, #tpu.memory_space<smem>>
    %258 = vector.broadcast %257 : f32 to vector<1x256xf32>
    %259 = arith.mulf %258, %45 : vector<1x256xf32>
    %260 = arith.addf %256, %259 : vector<1x256xf32>
    %c24 = arith.constant 24 : index
    %261 = memref.load %arg4[%c24] : memref<98xf32, #tpu.memory_space<smem>>
    %262 = vector.broadcast %261 : f32 to vector<1x256xf32>
    %263 = arith.mulf %262, %47 : vector<1x256xf32>
    %264 = arith.addf %260, %263 : vector<1x256xf32>
    %c31 = arith.constant 31 : index
    %265 = memref.load %arg4[%c31] : memref<98xf32, #tpu.memory_space<smem>>
    %266 = vector.broadcast %265 : f32 to vector<1x256xf32>
    %267 = arith.mulf %266, %49 : vector<1x256xf32>
    %268 = arith.addf %264, %267 : vector<1x256xf32>
    %c38 = arith.constant 38 : index
    %269 = memref.load %arg4[%c38] : memref<98xf32, #tpu.memory_space<smem>>
    %270 = vector.broadcast %269 : f32 to vector<1x256xf32>
    %271 = arith.mulf %270, %51 : vector<1x256xf32>
    %272 = arith.addf %268, %271 : vector<1x256xf32>
    %c45 = arith.constant 45 : index
    %273 = memref.load %arg4[%c45] : memref<98xf32, #tpu.memory_space<smem>>
    %274 = vector.broadcast %273 : f32 to vector<1x256xf32>
    %275 = arith.mulf %274, %53 : vector<1x256xf32>
    %276 = arith.addf %272, %275 : vector<1x256xf32>
    %c52 = arith.constant 52 : index
    %277 = memref.load %arg4[%c52] : memref<98xf32, #tpu.memory_space<smem>>
    %278 = vector.broadcast %277 : f32 to vector<1x256xf32>
    %279 = arith.mulf %278, %55 : vector<1x256xf32>
    %280 = arith.addf %276, %279 : vector<1x256xf32>
    %c59 = arith.constant 59 : index
    %281 = memref.load %arg4[%c59] : memref<98xf32, #tpu.memory_space<smem>>
    %282 = vector.broadcast %281 : f32 to vector<1x256xf32>
    %283 = arith.mulf %282, %57 : vector<1x256xf32>
    %284 = arith.addf %280, %283 : vector<1x256xf32>
    %c66 = arith.constant 66 : index
    %285 = memref.load %arg4[%c66] : memref<98xf32, #tpu.memory_space<smem>>
    %286 = vector.broadcast %285 : f32 to vector<1x256xf32>
    %287 = arith.mulf %286, %59 : vector<1x256xf32>
    %288 = arith.addf %284, %287 : vector<1x256xf32>
    %c73 = arith.constant 73 : index
    %289 = memref.load %arg4[%c73] : memref<98xf32, #tpu.memory_space<smem>>
    %290 = vector.broadcast %289 : f32 to vector<1x256xf32>
    %291 = arith.mulf %290, %61 : vector<1x256xf32>
    %292 = arith.addf %288, %291 : vector<1x256xf32>
    %c80_70 = arith.constant 80 : index
    %293 = memref.load %arg4[%c80_70] : memref<98xf32, #tpu.memory_space<smem>>
    %294 = vector.broadcast %293 : f32 to vector<1x256xf32>
    %295 = arith.mulf %294, %63 : vector<1x256xf32>
    %296 = arith.addf %292, %295 : vector<1x256xf32>
    %c87 = arith.constant 87 : index
    %297 = memref.load %arg4[%c87] : memref<98xf32, #tpu.memory_space<smem>>
    %298 = vector.broadcast %297 : f32 to vector<1x256xf32>
    %299 = arith.mulf %298, %65 : vector<1x256xf32>
    %300 = arith.addf %296, %299 : vector<1x256xf32>
    %c94 = arith.constant 94 : index
    %301 = memref.load %arg4[%c94] : memref<98xf32, #tpu.memory_space<smem>>
    %302 = vector.broadcast %301 : f32 to vector<1x256xf32>
    %303 = arith.mulf %302, %67 : vector<1x256xf32>
    %304 = arith.addf %300, %303 : vector<1x256xf32>
    %305 = arith.addf %249, %304 : vector<1x256xf32>
    %c4 = arith.constant 4 : index
    %306 = memref.load %arg4[%c4] : memref<98xf32, #tpu.memory_space<smem>>
    %307 = vector.broadcast %306 : f32 to vector<1x256xf32>
    %308 = arith.mulf %307, %41 : vector<1x256xf32>
    %c11 = arith.constant 11 : index
    %309 = memref.load %arg4[%c11] : memref<98xf32, #tpu.memory_space<smem>>
    %310 = vector.broadcast %309 : f32 to vector<1x256xf32>
    %311 = arith.mulf %310, %43 : vector<1x256xf32>
    %312 = arith.addf %308, %311 : vector<1x256xf32>
    %c18 = arith.constant 18 : index
    %313 = memref.load %arg4[%c18] : memref<98xf32, #tpu.memory_space<smem>>
    %314 = vector.broadcast %313 : f32 to vector<1x256xf32>
    %315 = arith.mulf %314, %45 : vector<1x256xf32>
    %316 = arith.addf %312, %315 : vector<1x256xf32>
    %c25 = arith.constant 25 : index
    %317 = memref.load %arg4[%c25] : memref<98xf32, #tpu.memory_space<smem>>
    %318 = vector.broadcast %317 : f32 to vector<1x256xf32>
    %319 = arith.mulf %318, %47 : vector<1x256xf32>
    %320 = arith.addf %316, %319 : vector<1x256xf32>
    %c32 = arith.constant 32 : index
    %321 = memref.load %arg4[%c32] : memref<98xf32, #tpu.memory_space<smem>>
    %322 = vector.broadcast %321 : f32 to vector<1x256xf32>
    %323 = arith.mulf %322, %49 : vector<1x256xf32>
    %324 = arith.addf %320, %323 : vector<1x256xf32>
    %c39 = arith.constant 39 : index
    %325 = memref.load %arg4[%c39] : memref<98xf32, #tpu.memory_space<smem>>
    %326 = vector.broadcast %325 : f32 to vector<1x256xf32>
    %327 = arith.mulf %326, %51 : vector<1x256xf32>
    %328 = arith.addf %324, %327 : vector<1x256xf32>
    %c46 = arith.constant 46 : index
    %329 = memref.load %arg4[%c46] : memref<98xf32, #tpu.memory_space<smem>>
    %330 = vector.broadcast %329 : f32 to vector<1x256xf32>
    %331 = arith.mulf %330, %53 : vector<1x256xf32>
    %332 = arith.addf %328, %331 : vector<1x256xf32>
    %c53 = arith.constant 53 : index
    %333 = memref.load %arg4[%c53] : memref<98xf32, #tpu.memory_space<smem>>
    %334 = vector.broadcast %333 : f32 to vector<1x256xf32>
    %335 = arith.mulf %334, %55 : vector<1x256xf32>
    %336 = arith.addf %332, %335 : vector<1x256xf32>
    %c60 = arith.constant 60 : index
    %337 = memref.load %arg4[%c60] : memref<98xf32, #tpu.memory_space<smem>>
    %338 = vector.broadcast %337 : f32 to vector<1x256xf32>
    %339 = arith.mulf %338, %57 : vector<1x256xf32>
    %340 = arith.addf %336, %339 : vector<1x256xf32>
    %c67 = arith.constant 67 : index
    %341 = memref.load %arg4[%c67] : memref<98xf32, #tpu.memory_space<smem>>
    %342 = vector.broadcast %341 : f32 to vector<1x256xf32>
    %343 = arith.mulf %342, %59 : vector<1x256xf32>
    %344 = arith.addf %340, %343 : vector<1x256xf32>
    %c74 = arith.constant 74 : index
    %345 = memref.load %arg4[%c74] : memref<98xf32, #tpu.memory_space<smem>>
    %346 = vector.broadcast %345 : f32 to vector<1x256xf32>
    %347 = arith.mulf %346, %61 : vector<1x256xf32>
    %348 = arith.addf %344, %347 : vector<1x256xf32>
    %c81 = arith.constant 81 : index
    %349 = memref.load %arg4[%c81] : memref<98xf32, #tpu.memory_space<smem>>
    %350 = vector.broadcast %349 : f32 to vector<1x256xf32>
    %351 = arith.mulf %350, %63 : vector<1x256xf32>
    %352 = arith.addf %348, %351 : vector<1x256xf32>
    %c88 = arith.constant 88 : index
    %353 = memref.load %arg4[%c88] : memref<98xf32, #tpu.memory_space<smem>>
    %354 = vector.broadcast %353 : f32 to vector<1x256xf32>
    %355 = arith.mulf %354, %65 : vector<1x256xf32>
    %356 = arith.addf %352, %355 : vector<1x256xf32>
    %c95 = arith.constant 95 : index
    %357 = memref.load %arg4[%c95] : memref<98xf32, #tpu.memory_space<smem>>
    %358 = vector.broadcast %357 : f32 to vector<1x256xf32>
    %359 = arith.mulf %358, %67 : vector<1x256xf32>
    %360 = arith.addf %356, %359 : vector<1x256xf32>
    %361 = vector.extract_strided_slice %360 {offsets = [0, 1], sizes = [1, 255], strides = [1, 1]} : vector<1x256xf32> to vector<1x255xf32>
    %362 = vector.extract_strided_slice %360 {offsets = [0, 0], sizes = [1, 1], strides = [1, 1]} : vector<1x256xf32> to vector<1x1xf32>
    %363 = tpu.concatenate %361, %362 in 1 : vector<1x255xf32>, vector<1x1xf32> -> vector<1x256xf32>
    %c4_71 = arith.constant 4 : index
    %c0_72 = arith.constant 0 : index
    %364 = vector.load %arg5[%c4_71, %c0_72] : memref<7x256xf32, #tpu.memory_space<vmem>>, vector<1x256xf32>
    %365 = arith.mulf %363, %364 : vector<1x256xf32>
    %366 = arith.addf %305, %365 : vector<1x256xf32>
    %c5 = arith.constant 5 : index
    %367 = memref.load %arg4[%c5] : memref<98xf32, #tpu.memory_space<smem>>
    %368 = vector.broadcast %367 : f32 to vector<1x256xf32>
    %369 = arith.mulf %368, %41 : vector<1x256xf32>
    %c12 = arith.constant 12 : index
    %370 = memref.load %arg4[%c12] : memref<98xf32, #tpu.memory_space<smem>>
    %371 = vector.broadcast %370 : f32 to vector<1x256xf32>
    %372 = arith.mulf %371, %43 : vector<1x256xf32>
    %373 = arith.addf %369, %372 : vector<1x256xf32>
    %c19 = arith.constant 19 : index
    %374 = memref.load %arg4[%c19] : memref<98xf32, #tpu.memory_space<smem>>
    %375 = vector.broadcast %374 : f32 to vector<1x256xf32>
    %376 = arith.mulf %375, %45 : vector<1x256xf32>
    %377 = arith.addf %373, %376 : vector<1x256xf32>
    %c26 = arith.constant 26 : index
    %378 = memref.load %arg4[%c26] : memref<98xf32, #tpu.memory_space<smem>>
    %379 = vector.broadcast %378 : f32 to vector<1x256xf32>
    %380 = arith.mulf %379, %47 : vector<1x256xf32>
    %381 = arith.addf %377, %380 : vector<1x256xf32>
    %c33 = arith.constant 33 : index
    %382 = memref.load %arg4[%c33] : memref<98xf32, #tpu.memory_space<smem>>
    %383 = vector.broadcast %382 : f32 to vector<1x256xf32>
    %384 = arith.mulf %383, %49 : vector<1x256xf32>
    %385 = arith.addf %381, %384 : vector<1x256xf32>
    %c40 = arith.constant 40 : index
    %386 = memref.load %arg4[%c40] : memref<98xf32, #tpu.memory_space<smem>>
    %387 = vector.broadcast %386 : f32 to vector<1x256xf32>
    %388 = arith.mulf %387, %51 : vector<1x256xf32>
    %389 = arith.addf %385, %388 : vector<1x256xf32>
    %c47 = arith.constant 47 : index
    %390 = memref.load %arg4[%c47] : memref<98xf32, #tpu.memory_space<smem>>
    %391 = vector.broadcast %390 : f32 to vector<1x256xf32>
    %392 = arith.mulf %391, %53 : vector<1x256xf32>
    %393 = arith.addf %389, %392 : vector<1x256xf32>
    %c54 = arith.constant 54 : index
    %394 = memref.load %arg4[%c54] : memref<98xf32, #tpu.memory_space<smem>>
    %395 = vector.broadcast %394 : f32 to vector<1x256xf32>
    %396 = arith.mulf %395, %55 : vector<1x256xf32>
    %397 = arith.addf %393, %396 : vector<1x256xf32>
    %c61 = arith.constant 61 : index
    %398 = memref.load %arg4[%c61] : memref<98xf32, #tpu.memory_space<smem>>
    %399 = vector.broadcast %398 : f32 to vector<1x256xf32>
    %400 = arith.mulf %399, %57 : vector<1x256xf32>
    %401 = arith.addf %397, %400 : vector<1x256xf32>
    %c68 = arith.constant 68 : index
    %402 = memref.load %arg4[%c68] : memref<98xf32, #tpu.memory_space<smem>>
    %403 = vector.broadcast %402 : f32 to vector<1x256xf32>
    %404 = arith.mulf %403, %59 : vector<1x256xf32>
    %405 = arith.addf %401, %404 : vector<1x256xf32>
    %c75 = arith.constant 75 : index
    %406 = memref.load %arg4[%c75] : memref<98xf32, #tpu.memory_space<smem>>
    %407 = vector.broadcast %406 : f32 to vector<1x256xf32>
    %408 = arith.mulf %407, %61 : vector<1x256xf32>
    %409 = arith.addf %405, %408 : vector<1x256xf32>
    %c82 = arith.constant 82 : index
    %410 = memref.load %arg4[%c82] : memref<98xf32, #tpu.memory_space<smem>>
    %411 = vector.broadcast %410 : f32 to vector<1x256xf32>
    %412 = arith.mulf %411, %63 : vector<1x256xf32>
    %413 = arith.addf %409, %412 : vector<1x256xf32>
    %c89 = arith.constant 89 : index
    %414 = memref.load %arg4[%c89] : memref<98xf32, #tpu.memory_space<smem>>
    %415 = vector.broadcast %414 : f32 to vector<1x256xf32>
    %416 = arith.mulf %415, %65 : vector<1x256xf32>
    %417 = arith.addf %413, %416 : vector<1x256xf32>
    %c96_73 = arith.constant 96 : index
    %418 = memref.load %arg4[%c96_73] : memref<98xf32, #tpu.memory_space<smem>>
    %419 = vector.broadcast %418 : f32 to vector<1x256xf32>
    %420 = arith.mulf %419, %67 : vector<1x256xf32>
    %421 = arith.addf %417, %420 : vector<1x256xf32>
    %422 = vector.extract_strided_slice %421 {offsets = [0, 2], sizes = [1, 254], strides = [1, 1]} : vector<1x256xf32> to vector<1x254xf32>
    %423 = vector.extract_strided_slice %421 {offsets = [0, 0], sizes = [1, 2], strides = [1, 1]} : vector<1x256xf32> to vector<1x2xf32>
    %424 = tpu.concatenate %422, %423 in 1 : vector<1x254xf32>, vector<1x2xf32> -> vector<1x256xf32>
    %c5_74 = arith.constant 5 : index
    %c0_75 = arith.constant 0 : index
    %425 = vector.load %arg5[%c5_74, %c0_75] : memref<7x256xf32, #tpu.memory_space<vmem>>, vector<1x256xf32>
    %426 = arith.mulf %424, %425 : vector<1x256xf32>
    %427 = arith.addf %366, %426 : vector<1x256xf32>
    %c6 = arith.constant 6 : index
    %428 = memref.load %arg4[%c6] : memref<98xf32, #tpu.memory_space<smem>>
    %429 = vector.broadcast %428 : f32 to vector<1x256xf32>
    %430 = arith.mulf %429, %41 : vector<1x256xf32>
    %c13 = arith.constant 13 : index
    %431 = memref.load %arg4[%c13] : memref<98xf32, #tpu.memory_space<smem>>
    %432 = vector.broadcast %431 : f32 to vector<1x256xf32>
    %433 = arith.mulf %432, %43 : vector<1x256xf32>
    %434 = arith.addf %430, %433 : vector<1x256xf32>
    %c20 = arith.constant 20 : index
    %435 = memref.load %arg4[%c20] : memref<98xf32, #tpu.memory_space<smem>>
    %436 = vector.broadcast %435 : f32 to vector<1x256xf32>
    %437 = arith.mulf %436, %45 : vector<1x256xf32>
    %438 = arith.addf %434, %437 : vector<1x256xf32>
    %c27 = arith.constant 27 : index
    %439 = memref.load %arg4[%c27] : memref<98xf32, #tpu.memory_space<smem>>
    %440 = vector.broadcast %439 : f32 to vector<1x256xf32>
    %441 = arith.mulf %440, %47 : vector<1x256xf32>
    %442 = arith.addf %438, %441 : vector<1x256xf32>
    %c34 = arith.constant 34 : index
    %443 = memref.load %arg4[%c34] : memref<98xf32, #tpu.memory_space<smem>>
    %444 = vector.broadcast %443 : f32 to vector<1x256xf32>
    %445 = arith.mulf %444, %49 : vector<1x256xf32>
    %446 = arith.addf %442, %445 : vector<1x256xf32>
    %c41 = arith.constant 41 : index
    %447 = memref.load %arg4[%c41] : memref<98xf32, #tpu.memory_space<smem>>
    %448 = vector.broadcast %447 : f32 to vector<1x256xf32>
    %449 = arith.mulf %448, %51 : vector<1x256xf32>
    %450 = arith.addf %446, %449 : vector<1x256xf32>
    %c48 = arith.constant 48 : index
    %451 = memref.load %arg4[%c48] : memref<98xf32, #tpu.memory_space<smem>>
    %452 = vector.broadcast %451 : f32 to vector<1x256xf32>
    %453 = arith.mulf %452, %53 : vector<1x256xf32>
    %454 = arith.addf %450, %453 : vector<1x256xf32>
    %c55 = arith.constant 55 : index
    %455 = memref.load %arg4[%c55] : memref<98xf32, #tpu.memory_space<smem>>
    %456 = vector.broadcast %455 : f32 to vector<1x256xf32>
    %457 = arith.mulf %456, %55 : vector<1x256xf32>
    %458 = arith.addf %454, %457 : vector<1x256xf32>
    %c62 = arith.constant 62 : index
    %459 = memref.load %arg4[%c62] : memref<98xf32, #tpu.memory_space<smem>>
    %460 = vector.broadcast %459 : f32 to vector<1x256xf32>
    %461 = arith.mulf %460, %57 : vector<1x256xf32>
    %462 = arith.addf %458, %461 : vector<1x256xf32>
    %c69 = arith.constant 69 : index
    %463 = memref.load %arg4[%c69] : memref<98xf32, #tpu.memory_space<smem>>
    %464 = vector.broadcast %463 : f32 to vector<1x256xf32>
    %465 = arith.mulf %464, %59 : vector<1x256xf32>
    %466 = arith.addf %462, %465 : vector<1x256xf32>
    %c76 = arith.constant 76 : index
    %467 = memref.load %arg4[%c76] : memref<98xf32, #tpu.memory_space<smem>>
    %468 = vector.broadcast %467 : f32 to vector<1x256xf32>
    %469 = arith.mulf %468, %61 : vector<1x256xf32>
    %470 = arith.addf %466, %469 : vector<1x256xf32>
    %c83 = arith.constant 83 : index
    %471 = memref.load %arg4[%c83] : memref<98xf32, #tpu.memory_space<smem>>
    %472 = vector.broadcast %471 : f32 to vector<1x256xf32>
    %473 = arith.mulf %472, %63 : vector<1x256xf32>
    %474 = arith.addf %470, %473 : vector<1x256xf32>
    %c90 = arith.constant 90 : index
    %475 = memref.load %arg4[%c90] : memref<98xf32, #tpu.memory_space<smem>>
    %476 = vector.broadcast %475 : f32 to vector<1x256xf32>
    %477 = arith.mulf %476, %65 : vector<1x256xf32>
    %478 = arith.addf %474, %477 : vector<1x256xf32>
    %c97 = arith.constant 97 : index
    %479 = memref.load %arg4[%c97] : memref<98xf32, #tpu.memory_space<smem>>
    %480 = vector.broadcast %479 : f32 to vector<1x256xf32>
    %481 = arith.mulf %480, %67 : vector<1x256xf32>
    %482 = arith.addf %478, %481 : vector<1x256xf32>
    %483 = vector.extract_strided_slice %482 {offsets = [0, 3], sizes = [1, 253], strides = [1, 1]} : vector<1x256xf32> to vector<1x253xf32>
    %484 = vector.extract_strided_slice %482 {offsets = [0, 0], sizes = [1, 3], strides = [1, 1]} : vector<1x256xf32> to vector<1x3xf32>
    %485 = tpu.concatenate %483, %484 in 1 : vector<1x253xf32>, vector<1x3xf32> -> vector<1x256xf32>
    %c6_76 = arith.constant 6 : index
    %c0_77 = arith.constant 0 : index
    %486 = vector.load %arg5[%c6_76, %c0_77] : memref<7x256xf32, #tpu.memory_space<vmem>>, vector<1x256xf32>
    %487 = arith.mulf %485, %486 : vector<1x256xf32>
    %488 = arith.addf %427, %487 : vector<1x256xf32>
    %489 = arith.negf %488 : vector<1x256xf32>
    %490 = math.exp %489 : vector<1x256xf32>
    %cst_78 = arith.constant 1.000000e+00 : f32
    %491 = vector.broadcast %cst_78 : f32 to vector<1x256xf32>
    %492 = arith.addf %491, %490 : vector<1x256xf32>
    %493 = arith.divf %491, %492 : vector<1x256xf32>
    %c0_79 = arith.constant 0 : index
    %c0_80 = arith.constant 0 : index
    %c0_81 = arith.constant 0 : index
    %494 = vector.load %arg6[%c0_79, %c0_80, %c0_81] : memref<1x32x256xf32, #tpu.memory_space<vmem>>, vector<1x32x256xf32>
    %495 = vector.shape_cast %493 : vector<1x256xf32> to vector<1x1x256xf32>
    %496 = vector.broadcast %495 : vector<1x1x256xf32> to vector<1x32x256xf32>
    %497 = arith.mulf %494, %496 : vector<1x32x256xf32>
    %c0_82 = arith.constant 0 : index
    %c0_83 = arith.constant 0 : index
    %c0_84 = arith.constant 0 : index
    %498 = vector.load %arg6[%c0_82, %c0_83, %c0_84] : memref<1x32x256xf32, #tpu.memory_space<vmem>>, vector<1x32x256xf32>
    tpu.vector_store %arg6[%c0_82, %c0_83, %c0_84], %497 {strides = array<i32>} : memref<1x32x256xf32, #tpu.memory_space<vmem>>, vector<1x32x256xf32>,
    return
  }
  func.func @transform_0(%arg0: i32) -> (i32, i32, i32) {
    %c0_i32 = arith.constant 0 : i32
    %c0_i32_0 = arith.constant 0 : i32
    %c0_i32_1 = arith.constant 0 : i32
    return %arg0, %c0_i32, %c0_i32_0 : i32, i32, i32
  }
  func.func @transform_1(%arg0: i32) -> (i32, i32) {
    %c0_i32 = arith.constant 0 : i32
    %c0_i32_0 = arith.constant 0 : i32
    %c0_i32_1 = arith.constant 0 : i32
    return %c0_i32, %c0_i32_0 : i32, i32
  }
  func.func @transform_2(%arg0: i32) -> (i32, i32) {
    %c0_i32 = arith.constant 0 : i32
    %c0_i32_0 = arith.constant 0 : i32
    %c0_i32_1 = arith.constant 0 : i32
    return %c0_i32, %c0_i32_0 : i32, i32
  }
  func.func @transform_3(%arg0: i32) -> i32 {
    %c0_i32 = arith.constant 0 : i32
    %c0_i32_0 = arith.constant 0 : i32
    return %c0_i32 : i32
  }
  func.func @transform_4(%arg0: i32) -> (i32, i32) {
    %c0_i32 = arith.constant 0 : i32
    %c0_i32_0 = arith.constant 0 : i32
    %c0_i32_1 = arith.constant 0 : i32
    return %c0_i32, %c0_i32_0 : i32, i32
  }
  func.func @transform_5(%arg0: i32) -> (i32, i32, i32) {
    %c0_i32 = arith.constant 0 : i32
    %c0_i32_0 = arith.constant 0 : i32
    %c0_i32_1 = arith.constant 0 : i32
    return %arg0, %c0_i32, %c0_i32_0 : i32, i32, i32
  }
}

</mosaic_0001>

<llo_original>
// kernel: tpu_custom_call.1
$region0: #{tpu_custom_call.1}
  #allocation0 [shape = 'u32[]', space=smem, size = 0x4, offset = 0x4, fixed_abs, tag = 'smem constant byte address 0x4 - core index']
  #allocation1 [shape = 'u32[144,128]{1,0:T(1,128)}', space=vmem, size = 0x12000, scoped, tag = 'internal scratch']
  #allocation2 [shape = 'f32[1,2,512]{2,1,0:T(2,128)}', space=vmem, size = 0x1000, scoped, tag = 'scratch operand']
  %s0 = inlined_call_operand.hbm [shape: f32[2,32,256], index: 0, kind: input, shape index: {}]
  %s1 = inlined_call_operand.vmem [shape: f32[32,2], index: 1, kind: input, shape index: {}]
  %s2 = inlined_call_operand.vmem [shape: f32[2,32], index: 2, kind: input, shape index: {}]
  %s3 = inlined_call_operand.vmem [shape: f32[98], index: 3, kind: input, shape index: {}]
  %s4 = inlined_call_operand.vmem [shape: f32[7,256], index: 4, kind: input, shape index: {}]
  %s5 = inlined_call_operand.hbm [shape: f32[2,32,256], index: 5, kind: output, shape index: {}]
  %s6 = sld [smem:[#allocation0]]
  $region61: #{tpu_custom_call.1} parent=0
    _
  %s8 = ssub.s32 1, %s6
  %s9 = scalar_select 0, %s8, %s6
  $region1: #{tpu_custom_call.1} parent=0
    #allocation3 [shape = 'u8[65536]{0}', space=vmem, size = 0x10000, scoped, tag = 'input window, operand 0']
    #allocation4 [shape = 's32[2]{0}', space=sflag, size = 0x8, scoped, tag = 'scoped memory for tpu_custom_call.1']
    #allocation5 [shape = 's32[2]{0}', space=sflag, size = 0x8, scoped, tag = 'scoped memory for tpu_custom_call.1']
    #allocation6 [shape = 's32[2]{0}', space=sflag, size = 0x8, scoped, tag = 'scoped memory for tpu_custom_call.1']
    #allocation7 [shape = 'u8[512]{0}', space=smem, size = 0x200, scoped, tag = 'input window, operand 3, single buffered']
    #allocation8 [shape = 'u8[65536]{0}', space=vmem, size = 0x10000, scoped, tag = 'output window, operand 0']
    %10 = vsyncpa [#allocation4], 0
    %s11 = scalar_lea.sflag [#allocation4], 1
    %12 = vsyncpa %s11, 0
    %13 = vsyncpa [#allocation6], 0
    %14 = vsyncpa [#allocation5], 0
    %s15 = scalar_lea.sflag [#allocation5], 1
    %16 = vsyncpa %s15, 0
    loop: start=0, step=1, limit=4
    $region2: #{tpu_custom_call.1} parent=1 // loop_pre_header
      _
    $region3: #{tpu_custom_call.1} parent=1 // loop_header
      %s18 = sphi 0, %s22
      %p19 = scmp.ge.s32.totalorder %s18, 4
      %s28 = sphi 0, %s30
      %s31 = sphi 0, %s28
      %s32 = sphi 0, %s31
      %s48 = sphi 0, %s32
      %s52 = sphi 0, %s52
      %s54 = sphi 0, %s52
      %s55 = sphi 0, %s54
      %s69 = sphi 0, %s55
      %s73 = sphi 0, %s73
      %s75 = sphi 0, %s73
      %s76 = sphi 0, %s75
      %s90 = sphi 0, %s76
      %s94 = sphi 0, %s94
      %s96 = sphi 0, %s94
      %s97 = sphi 0, %s96
      %s111 = sphi 0, %s97
      %s115 = sphi 0, %s115
      %s117 = sphi 0, %s115
      %s118 = sphi 0, %s117
      %s132 = sphi 0, %s118
      %s138 = sphi 0, %s140
      %s141 = sphi 0, %s138
      %s142 = sphi 0, %s141
      %s158 = sphi 0, %s142
    $region4: #{tpu_custom_call.1} parent=1 // loop_header_branch
      %21 = sbr.rel (%p19) target = $region8
    $region5: #{tpu_custom_call.1} parent=1 // loop_body
      %s23 = ssub.s32 %s18, 1
      %s24 = ssub.s32 %s18, 2
      %s25 = sadd.s32 %s18, 1
      %s26 = ssub.s32 %s18, %s25
      %p27 = scmp.eq.s32.totalorder %s26, 0
      %s29 = sadd.s32 %s28, 1
      %s30 = scalar_select %p27, %s28, %s29
      %p33 = pneg %p27
      %p34 = scmp.eq.s32.totalorder %s18, 1
      %p35 = por %p33, %p34
      %p36 = scmp.ne.s32.totalorder %s28, %s31
      %p37 = scmp.eq.s32.totalorder %s18, 0
      %p38 = por %p36, %p37
      %p39 = scmp.ne.s32.totalorder %s28, %s31
      %p40 = scmp.eq.s32.totalorder %s23, 1
      %p41 = por %p39, %p40
      %p42 = scmp.ne.s32.totalorder %s31, %s32
      %p43 = scmp.eq.s32.totalorder %s23, 0
      %p44 = por %p42, %p43
      %p45 = scmp.ne.s32.totalorder %s31, %s32
      %p46 = scmp.eq.s32.totalorder %s24, 1
      %p47 = por %p45, %p46
      %p49 = scmp.ne.s32.totalorder %s32, %s48
      %p50 = scmp.eq.s32.totalorder %s24, 0
      %p51 = por %p49, %p50
      %s53 = sadd.s32 %s52, 1
      %p56 = scmp.eq.s32.totalorder %s18, 1
      %p57 = scmp.ne.s32.totalorder %s52, %s54
      %p58 = scmp.eq.s32.totalorder %s18, 0
      %p59 = por %p57, %p58
      %p60 = scmp.ne.s32.totalorder %s52, %s54
      %p61 = scmp.eq.s32.totalorder %s23, 1
      %p62 = por %p60, %p61
      %p63 = scmp.ne.s32.totalorder %s54, %s55
      %p64 = scmp.eq.s32.totalorder %s23, 0
      %p65 = por %p63, %p64
      %p66 = scmp.ne.s32.totalorder %s54, %s55
      %p67 = scmp.eq.s32.totalorder %s24, 1
      %p68 = por %p66, %p67
      %p70 = scmp.ne.s32.totalorder %s55, %s69
      %p71 = scmp.eq.s32.totalorder %s24, 0
      %p72 = por %p70, %p71
      %s74 = sadd.s32 %s73, 1
      %p77 = scmp.eq.s32.totalorder %s18, 1
      %p78 = scmp.ne.s32.totalorder %s73, %s75
      %p79 = scmp.eq.s32.totalorder %s18, 0
      %p80 = por %p78, %p79
      %p81 = scmp.ne.s32.totalorder %s73, %s75
      %p82 = scmp.eq.s32.totalorder %s23, 1
      %p83 = por %p81, %p82
      %p84 = scmp.ne.s32.totalorder %s75, %s76
      %p85 = scmp.eq.s32.totalorder %s23, 0
      %p86 = por %p84, %p85
      %p87 = scmp.ne.s32.totalorder %s75, %s76
      %p88 = scmp.eq.s32.totalorder %s24, 1
      %p89 = por %p87, %p88
      %p91 = scmp.ne.s32.totalorder %s76, %s90
      %p92 = scmp.eq.s32.totalorder %s24, 0
      %p93 = por %p91, %p92
      %s95 = sadd.s32 %s94, 1
      %p98 = scmp.eq.s32.totalorder %s18, 1
      %p99 = scmp.ne.s32.totalorder %s94, %s96
      %p100 = scmp.eq.s32.totalorder %s18, 0
      %p101 = por %p99, %p100
      %p102 = scmp.ne.s32.totalorder %s94, %s96
      %p103 = scmp.eq.s32.totalorder %s23, 1
      %p104 = por %p102, %p103
      %p105 = scmp.ne.s32.totalorder %s96, %s97
      %p106 = scmp.eq.s32.totalorder %s23, 0
      %p107 = por %p105, %p106
      %p108 = scmp.ne.s32.totalorder %s96, %s97
      %p109 = scmp.eq.s32.totalorder %s24, 1
      %p110 = por %p108, %p109
      %p112 = scmp.ne.s32.totalorder %s97, %s111
      %p113 = scmp.eq.s32.totalorder %s24, 0
      %p114 = por %p112, %p113
      %s116 = sadd.s32 %s115, 1
      %p119 = scmp.eq.s32.totalorder %s18, 1
      %p120 = scmp.ne.s32.totalorder %s115, %s117
      %p121 = scmp.eq.s32.totalorder %s18, 0
      %p122 = por %p120, %p121
      %p123 = scmp.ne.s32.totalorder %s115, %s117
      %p124 = scmp.eq.s32.totalorder %s23, 1
      %p125 = por %p123, %p124
      %p126 = scmp.ne.s32.totalorder %s117, %s118
      %p127 = scmp.eq.s32.totalorder %s23, 0
      %p128 = por %p126, %p127
      %p129 = scmp.ne.s32.totalorder %s117, %s118
      %p130 = scmp.eq.s32.totalorder %s24, 1
      %p131 = por %p129, %p130
      %p133 = scmp.ne.s32.totalorder %s118, %s132
      %p134 = scmp.eq.s32.totalorder %s24, 0
      %p135 = por %p133, %p134
      %s136 = ssub.s32 %s18, %s25
      %p137 = scmp.eq.s32.totalorder %s136, 0
      %s139 = sadd.s32 %s138, 1
      %s140 = scalar_select %p137, %s138, %s139
      %p143 = pneg %p137
      %p144 = scmp.eq.s32.totalorder %s18, 1
      %p145 = por %p143, %p144
      %p146 = scmp.ne.s32.totalorder %s138, %s141
      %p147 = scmp.eq.s32.totalorder %s18, 0
      %p148 = por %p146, %p147
      %p149 = scmp.ne.s32.totalorder %s138, %s141
      %p150 = scmp.eq.s32.totalorder %s23, 1
      %p151 = por %p149, %p150
      %p152 = scmp.ne.s32.totalorder %s141, %s142
      %p153 = scmp.eq.s32.totalorder %s23, 0
      %p154 = por %p152, %p153
      %p155 = scmp.ne.s32.totalorder %s141, %s142
      %p156 = scmp.eq.s32.totalorder %s24, 1
      %p157 = por %p155, %p156
      %p159 = scmp.ne.s32.totalorder %s142, %s158
      %p160 = scmp.eq.s32.totalorder %s24, 0
      %p161 = por %p159, %p160
      %p162 = scmp.le.s32.totalorder 1, %s18
      %p163 = scmp.lt.s32.totalorder %s18, 3
      %p164 = pnand %p162, %p163
      %p165 = pneg %p164
      // Predicated region
      $region9: #{tpu_custom_call.1} parent=5 // pred_check
        _
      $region10: #{tpu_custom_call.1} parent=5 // pred_check_branch
        %167 = sbr.rel (%p164) target = $region12
      $region11: #{tpu_custom_call.1} parent=5 // pred_region
        %s168 = ssub.s32 %s18, 1
        // Predicated region
        $region13: #{tpu_custom_call.1} parent=11 // pred_check
          %p169 = pneg %p65
        $region14: #{tpu_custom_call.1} parent=11 // pred_check_branch
          %171 = sbr.rel (%p169) target = $region16
        $region15: #{tpu_custom_call.1} parent=11 // pred_region
          _
        $region16: #{tpu_custom_call.1} parent=11 // pred_fallthru
          _
        // Predicated region
        $region17: #{tpu_custom_call.1} parent=11 // pred_check
          %p172 = pneg %p86
        $region18: #{tpu_custom_call.1} parent=11 // pred_check_branch
          %174 = sbr.rel (%p172) target = $region20
        $region19: #{tpu_custom_call.1} parent=11 // pred_region
          _
        $region20: #{tpu_custom_call.1} parent=11 // pred_fallthru
          _
        // Predicated region
        $region21: #{tpu_custom_call.1} parent=11 // pred_check
          %p175 = pneg %p107
        $region22: #{tpu_custom_call.1} parent=11 // pred_check_branch
          %177 = sbr.rel (%p175) target = $region24
        $region23: #{tpu_custom_call.1} parent=11 // pred_region
          %s179 = ssub.s32 16, 16
          %180 = vsyncadd [#allocation6], %s179
          %s182 = sshll.u32 %s3, 4
          %s183 = int_to_ptr.vmem [resolvable:$true] %s182
          %185 = dma.vmem_to_smem %s183, 16, [#allocation7], [#allocation6]
        $region24: #{tpu_custom_call.1} parent=11 // pred_fallthru
          _
        // Predicated region
        $region25: #{tpu_custom_call.1} parent=11 // pred_check
          %p186 = pneg %p128
        $region26: #{tpu_custom_call.1} parent=11 // pred_check_branch
          %188 = sbr.rel (%p186) target = $region28
        $region27: #{tpu_custom_call.1} parent=11 // pred_region
          _
        $region28: #{tpu_custom_call.1} parent=11 // pred_fallthru
          _
      $region12: #{tpu_custom_call.1} parent=5 // pred_fallthru
        _
      %p189 = scmp.lt.s32.totalorder %s18, 2
      // Predicated region
      $region29: #{tpu_custom_call.1} parent=5 // pred_check
        %p190 = pneg %p189
      $region30: #{tpu_custom_call.1} parent=5 // pred_check_branch
        %192 = sbr.rel (%p190) target = $region32
      $region31: #{tpu_custom_call.1} parent=5 // pred_region
        // Predicated region
        $region33: #{tpu_custom_call.1} parent=31 // pred_check
          %p193 = pneg %p38
        $region34: #{tpu_custom_call.1} parent=31 // pred_check_branch
          %195 = sbr.rel (%p193) target = $region36
        $region35: #{tpu_custom_call.1} parent=31 // pred_region
          %s196 = sand.u32 %s28, 1
          %s197 = scalar_lea.sflag [#allocation4], %s196
          %s198 = sand.u32 %s28, 1
          %s199 = smul.addr %s198, 64
          %s200 = scalar_lea.vmem [#allocation3], %s199
          %s202 = ssub.s32 1024, 1024
          %203 = vsyncadd %s197, %s202
          %s204 = smul.addr %s18, 8
          %s205 = smul.addr %s204, 128
          %s206 = scalar_lea.hbm %s0, %s205
          %s207 = sshll.u32 %s200, 4
          %s208 = int_to_ptr.vmem [resolvable:$true] %s207
          %213 = dma.hbm_to_vmem [thread:$0]  %s206, 1024, %s208, %s197, 256, 256, 16
        $region36: #{tpu_custom_call.1} parent=31 // pred_fallthru
          _
      $region32: #{tpu_custom_call.1} parent=5 // pred_fallthru
        _
      %p214 = scmp.le.s32.totalorder 1, %s18
      %p215 = scmp.lt.s32.totalorder %s18, 3
      %p216 = pnand %p214, %p215
      %p217 = pneg %p216
      // Predicated region
      $region37: #{tpu_custom_call.1} parent=5 // pred_check
        _
      $region38: #{tpu_custom_call.1} parent=5 // pred_check_branch
        %219 = sbr.rel (%p216) target = $region40
      $region39: #{tpu_custom_call.1} parent=5 // pred_region
        %s220 = ssub.s32 %s18, 1
        %s221 = sand.u32 %s31, 1
        %s222 = scalar_lea.sflag [#allocation4], %s221
        %s223 = sand.u32 %s31, 1
        %s224 = smul.addr %s223, 64
        %s225 = scalar_lea.vmem [#allocation3], %s224
        // Predicated region
        $region41: #{tpu_custom_call.1} parent=39 // pred_check
          %p226 = pneg %p44
        $region42: #{tpu_custom_call.1} parent=39 // pred_check_branch
          %228 = sbr.rel (%p226) target = $region44
        $region43: #{tpu_custom_call.1} parent=39 // pred_region
          %229 = dma.done %s222, 1024
        $region44: #{tpu_custom_call.1} parent=39 // pred_fallthru
          _
        // Predicated region
        $region45: #{tpu_custom_call.1} parent=39 // pred_check
          %p230 = pneg %p107
        $region46: #{tpu_custom_call.1} parent=39 // pred_check_branch
          %232 = sbr.rel (%p230) target = $region48
        $region47: #{tpu_custom_call.1} parent=39 // pred_region
          %233 = dma.done [#allocation6], 16
        $region48: #{tpu_custom_call.1} parent=39 // pred_fallthru
          _
        %234 = sfence
        %s235 = sand.u32 %s31, 1
        %s236 = scalar_lea.sflag [#allocation4], %s235
        %s237 = sand.u32 %s31, 1
        %s238 = smul.addr %s237, 64
        %s239 = scalar_lea.vmem [#allocation3], %s238
        %p240 = pneg %p44
        %p241 = pneg %p41
        %p242 = pneg %p65
        %p243 = pneg %p62
        %p244 = pneg %p86
        %p245 = pneg %p83
        %p246 = pneg %p107
        %p247 = pneg %p104
        %p248 = pneg %p128
        %p249 = pneg %p125
        %p250 = pneg %p154
        %p251 = pneg %p151
        %s252 = sand.u32 %s141, 1
        %s253 = scalar_lea.sflag [#allocation5], %s252
        %s254 = sand.u32 %s141, 1
        %s255 = smul.addr %s254, 64
        %s256 = scalar_lea.vmem [#allocation8], %s255
        %v257 = vld [vmem:[%s225] sm:$0xff]
        %v258 = vld [vmem:[%s225 + $0x8] sm:$0xff]
        %v259 = vld [vmem:[%s225 + $0x10] sm:$0xff]
        %v260 = vld [vmem:[%s225 + $0x18] sm:$0xff]
        %v261 = vld [vmem:[%s225 + $0x20] sm:$0xff]
        %v262 = vld [vmem:[%s225 + $0x28] sm:$0xff]
        %v263 = vld [vmem:[%s225 + $0x30] sm:$0xff]
        %v264 = vld [vmem:[%s225 + $0x38] sm:$0xff]
        %v265 = vadd.f32 %v257, %v258
        %266 = vadd.xlane.f32.xlu0 %v265
        %v267 = vpop.xlane.xlu0 %266
        %v268 = vadd.f32 %v259, %v260
        %269 = vadd.xlane.f32.xlu0 %v268
        %v270 = vpop.xlane.xlu0 %269
        %v271 = vadd.f32 %v261, %v262
        %272 = vadd.xlane.f32.xlu0 %v271
        %v273 = vpop.xlane.xlu0 %272
        %v274 = vadd.f32 %v263, %v264
        %275 = vadd.xlane.f32.xlu0 %v274
        %v276 = vpop.xlane.xlu0 %275
        %v277 = vmax.f32 %v257, %v258
        %278 = vmax.xlane.f32.xlu0 %v277
        %v279 = vpop.xlane.xlu0 %278
        %v280 = vmax.f32 %v259, %v260
        %281 = vmax.xlane.f32.xlu0 %v280
        %v282 = vpop.xlane.xlu0 %281
        %v283 = vmax.f32 %v261, %v262
        %284 = vmax.xlane.f32.xlu0 %v283
        %v285 = vpop.xlane.xlu0 %284
        %v286 = vmax.f32 %v263, %v264
        %287 = vmax.xlane.f32.xlu0 %v286
        %v288 = vpop.xlane.xlu0 %287
        %v289 = vmul.f32 %v267, 0.00390625
        %v290 = vmul.f32 %v270, 0.00390625
        %v291 = vmul.f32 %v273, 0.00390625
        %v292 = vmul.f32 %v276, 0.00390625
        %v297 = vlaneseq
        %v298 = vand.u32 %v297, 127
        %v299 = vlaneseq
        %v300 = vshrl.u32 %v299, 7
        %v301 = vsub.s32 %v298, %v300
        %v302 = vrot.slane %v289, %v301
        %v303 = vadd.s32 %v298, 4294967288
        %v304 = vlaneseq
        %v305 = vshrl.u32 %v304, 7
        %v306 = vsub.s32 %v303, %v305
        %v307 = vrot.slane %v290, %v306
        %vm308 = vcmask 130112
        %v309 = vsel %vm308, %v307, %v302
        %v310 = vadd.s32 %v298, 4294967280
        %v311 = vlaneseq
        %v312 = vshrl.u32 %v311, 7
        %v313 = vsub.s32 %v310, %v312
        %v314 = vrot.slane %v291, %v313
        %vm315 = vcmask 195712
        %v316 = vsel %vm315, %v314, %v309
        %v317 = vadd.s32 %v298, 4294967272
        %v318 = vlaneseq
        %v319 = vshrl.u32 %v318, 7
        %v320 = vsub.s32 %v317, %v319
        %v321 = vrot.slane %v292, %v320
        %vm322 = vcmask 261312
        %v323 = vsel %vm322, %v321, %v316
        %v329 = vlaneseq
        %v330 = vshrl.u32 %v329, 7
        %v331 = vsub.s32 %v298, %v330
        %v332 = vrot.slane %v279, %v331
        %v333 = vlaneseq
        %v334 = vshrl.u32 %v333, 7
        %v335 = vsub.s32 %v303, %v334
        %v336 = vrot.slane %v282, %v335
        %v337 = vsel %vm308, %v336, %v332
        %v338 = vlaneseq
        %v339 = vshrl.u32 %v338, 7
        %v340 = vsub.s32 %v310, %v339
        %v341 = vrot.slane %v285, %v340
        %v342 = vsel %vm315, %v341, %v337
        %v343 = vlaneseq
        %v344 = vshrl.u32 %v343, 7
        %v345 = vsub.s32 %v317, %v344
        %v346 = vrot.slane %v288, %v345
        %v347 = vsel %vm322, %v346, %v342
        %vm349 = vcmask 1040384
        %v350 = vsel %vm349, %v323, %v347
        %v351 = vld [vmem:[%s1] sm:$0xff]
        %v352 = vld [vmem:[%s1 + $0x8] sm:$0xff]
        %v353 = vld [vmem:[%s1 + $0x10] sm:$0xff]
        %v354 = vld [vmem:[%s1 + $0x18] sm:$0xff]
        %vm355 = vcmask 261120
        %v357 = vsel %vm355, %v350, 0
        %359 = vmatprep.subr.mxu0 0.0
        %360 = vmatpush1.msra.mxu0 0.0
        %361 = vmatprep.subr.mxu0 0.0
        %362 = vmatpush1.msra.mxu0 0.0
        %363 = vmatprep.subr.mxu0 0.0
        %364 = vmatpush1.msra.mxu0 0.0
        %365 = vmatprep.subr.mxu0 0.0
        %366 = vmatpush1.msra.mxu0 0.0
        %367 = vmatprep.subr.mxu0 0.0
        %368 = vmatpush1.msra.mxu0 0.0
        %369 = vmatprep.subr.mxu0 0.0
        %370 = vmatpush1.msra.mxu0 0.0
        %371 = vmatprep.subr.mxu0 0.0
        %372 = vmatpush1.msra.mxu0 0.0
        %373 = vmatprep.subr.mxu0 0.0
        %374 = vmatpush1.msra.mxu0 0.0
        %375 = vmatprep.subr.mxu0 0.0
        %376 = vmatpush1.msra.mxu0 0.0
        %377 = vmatprep.subr.mxu0 0.0
        %378 = vmatpush1.msra.mxu0 0.0
        %379 = vmatprep.subr.mxu0 0.0
        %380 = vmatpush1.msra.mxu0 0.0
        %381 = vmatprep.subr.mxu0 0.0
        %382 = vmatpush1.msra.mxu0 0.0
        %383 = vmatprep.subr.mxu0 0.0
        %384 = vmatpush1.msra.mxu0 %v354
        %385 = vmatprep.subr.mxu0 0.0
        %386 = vmatpush1.msra.mxu0 %v353
        %387 = vmatprep.subr.mxu0 0.0
        %388 = vmatpush1.msra.mxu0 %v352
        %389 = vmatprep.subr.mxu0 0.0
        %390 = vmatpush1.msra.mxu0 %v351
        %391 = vmatprep.subr.mxu0 0.0
        %392 = vmatpush2.msra.mxu0 0.0
        %393 = vmatprep.subr.mxu0 0.0
        %394 = vmatpush2.msra.mxu0 0.0
        %395 = vmatprep.subr.mxu0 0.0
        %396 = vmatpush2.msra.mxu0 0.0
        %397 = vmatprep.subr.mxu0 0.0
        %398 = vmatpush2.msra.mxu0 0.0
        %399 = vmatprep.subr.mxu0 0.0
        %400 = vmatpush2.msra.mxu0 0.0
        %401 = vmatprep.subr.mxu0 0.0
        %402 = vmatpush2.msra.mxu0 0.0
        %403 = vmatprep.subr.mxu0 0.0
        %404 = vmatpush2.msra.mxu0 0.0
        %405 = vmatprep.subr.mxu0 0.0
        %406 = vmatpush2.msra.mxu0 0.0
        %407 = vmatprep.subr.mxu0 0.0
        %408 = vmatpush2.msra.mxu0 0.0
        %409 = vmatprep.subr.mxu0 0.0
        %410 = vmatpush2.msra.mxu0 0.0
        %411 = vmatprep.subr.mxu0 0.0
        %412 = vmatpush2.msra.mxu0 0.0
        %413 = vmatprep.subr.mxu0 0.0
        %414 = vmatpush2.msra.mxu0 0.0
        %415 = vmatprep.subr.mxu0 0.0
        %416 = vmatpush2.msra.mxu0 0.0
        %417 = vmatprep.subr.mxu0 0.0
        %418 = vmatpush2.msra.mxu0 0.0
        %419 = vmatprep.subr.mxu0 0.0
        %420 = vmatpush2.msra.mxu0 0.0
        %421 = vmatprep.subr.mxu0 0.0
        %422 = vmatpush2.msra.mxu0 0.0
        %423 = vmatprep.mubr.f32.mxu0 0.0
        %424 = vmatmul.mubr.f32.gmra.mxu0 %v357
        %v425 = vpop.f32.mrf.mxu0
        %v426 = vadd.f32 0.0, %v425
        %v427 = vpop.f32.mrf.mxu0
        %428 = vdwg.mxu0
        %v429 = vmax.f32 %v426, 0.0
        %v430 = vld [vmem:[%s2] sm:$0x3]
        %vm431 = vcmask 15360
        %v433 = vsel %vm431, %v429, 0
        %vm435 = vcmask 1041408
        %v437 = vsel %vm435, %v430, 0
        %439 = vmatprep.subr.mxu0 0.0
        %440 = vmatpush1.msra.mxu0 0.0
        %441 = vmatprep.subr.mxu0 0.0
        %442 = vmatpush1.msra.mxu0 0.0
        %443 = vmatprep.subr.mxu0 0.0
        %444 = vmatpush1.msra.mxu0 0.0
        %445 = vmatprep.subr.mxu0 0.0
        %446 = vmatpush1.msra.mxu0 0.0
        %447 = vmatprep.subr.mxu0 0.0
        %448 = vmatpush1.msra.mxu0 0.0
        %449 = vmatprep.subr.mxu0 0.0
        %450 = vmatpush1.msra.mxu0 0.0
        %451 = vmatprep.subr.mxu0 0.0
        %452 = vmatpush1.msra.mxu0 0.0
        %453 = vmatprep.subr.mxu0 0.0
        %454 = vmatpush1.msra.mxu0 0.0
        %455 = vmatprep.subr.mxu0 0.0
        %456 = vmatpush1.msra.mxu0 0.0
        %457 = vmatprep.subr.mxu0 0.0
        %458 = vmatpush1.msra.mxu0 0.0
        %459 = vmatprep.subr.mxu0 0.0
        %460 = vmatpush1.msra.mxu0 0.0
        %461 = vmatprep.subr.mxu0 0.0
        %462 = vmatpush1.msra.mxu0 0.0
        %463 = vmatprep.subr.mxu0 0.0
        %464 = vmatpush1.msra.mxu0 0.0
        %465 = vmatprep.subr.mxu0 0.0
        %466 = vmatpush1.msra.mxu0 0.0
        %467 = vmatprep.subr.mxu0 0.0
        %468 = vmatpush1.msra.mxu0 0.0
        %469 = vmatprep.subr.mxu0 0.0
        %470 = vmatpush1.msra.mxu0 %v437
        %471 = vmatprep.subr.mxu0 0.0
        %472 = vmatpush2.msra.mxu0 0.0
        %473 = vmatprep.subr.mxu0 0.0
        %474 = vmatpush2.msra.mxu0 0.0
        %475 = vmatprep.subr.mxu0 0.0
        %476 = vmatpush2.msra.mxu0 0.0
        %477 = vmatprep.subr.mxu0 0.0
        %478 = vmatpush2.msra.mxu0 0.0
        %479 = vmatprep.subr.mxu0 0.0
        %480 = vmatpush2.msra.mxu0 0.0
        %481 = vmatprep.subr.mxu0 0.0
        %482 = vmatpush2.msra.mxu0 0.0
        %483 = vmatprep.subr.mxu0 0.0
        %484 = vmatpush2.msra.mxu0 0.0
        %485 = vmatprep.subr.mxu0 0.0
        %486 = vmatpush2.msra.mxu0 0.0
        %487 = vmatprep.subr.mxu0 0.0
        %488 = vmatpush2.msra.mxu0 0.0
        %489 = vmatprep.subr.mxu0 0.0
        %490 = vmatpush2.msra.mxu0 0.0
        %491 = vmatprep.subr.mxu0 0.0
        %492 = vmatpush2.msra.mxu0 0.0
        %493 = vmatprep.subr.mxu0 0.0
        %494 = vmatpush2.msra.mxu0 0.0
        %495 = vmatprep.subr.mxu0 0.0
        %496 = vmatpush2.msra.mxu0 0.0
        %497 = vmatprep.subr.mxu0 0.0
        %498 = vmatpush2.msra.mxu0 0.0
        %499 = vmatprep.subr.mxu0 0.0
        %500 = vmatpush2.msra.mxu0 0.0
        %501 = vmatprep.subr.mxu0 0.0
        %502 = vmatpush2.msra.mxu0 0.0
        %503 = vmatprep.mubr.f32.mxu0 0.0
        %504 = vmatmul.mubr.f32.gmra.mxu0 %v433
        %v505 = vpop.f32.mrf.mxu0
        %v506 = vadd.f32 0.0, %v505
        %v507 = vpop.f32.mrf.mxu0
        %508 = vdwg.mxu0
        %v510 = vrot.slane %v506, 1
        %v512 = vadd.f32 %v506, %v510
        %v513 = vxor.u32 %v512, 2147483648
        %v514 = vmul.f32 %v513, 1.442695
        %v515 = vpow.pop %v514
        %v516 = vadd.f32 %v515, 1.0
        %v517 = vrcp.pop %v516
        %v518 = vmul.f32 1.0, %v517
        %v519 = vlaneseq
        %v520 = vshrl.u32 %v519, 7
        %v521 = vsub.s32 0, %v520
        %v522 = vrot.slane %v518, %v521
        %524 = vbcast.lane.b32.xlu0 %v522, 256
        %v525 = vpop.permute.xlu0 %524
        %s527 = sor.u32 256, 8
        %528 = vbcast.lane.b32.xlu0 %v522, %s527
        %v529 = vpop.permute.xlu0 %528
        %s531 = sor.u32 256, 16
        %532 = vbcast.lane.b32.xlu0 %v522, %s531
        %v533 = vpop.permute.xlu0 %532
        %s535 = sor.u32 256, 24
        %536 = vbcast.lane.b32.xlu0 %v522, %s535
        %v537 = vpop.permute.xlu0 %536
        %v538 = vmul.f32 %v257, %v525
        %v539 = vmul.f32 %v258, %v525
        %v540 = vmul.f32 %v259, %v529
        %v541 = vmul.f32 %v260, %v529
        %v542 = vmul.f32 %v261, %v533
        %v543 = vmul.f32 %v262, %v533
        %v544 = vmul.f32 %v263, %v537
        %v545 = vmul.f32 %v264, %v537
        %546 = vst [vmem:[%s256] sm:$0xff] %v538
        %547 = vst [vmem:[%s256 + $0x8] sm:$0xff] %v539
        %548 = vst [vmem:[%s256 + $0x10] sm:$0xff] %v540
        %549 = vst [vmem:[%s256 + $0x18] sm:$0xff] %v541
        %550 = vst [vmem:[%s256 + $0x20] sm:$0xff] %v542
        %551 = vst [vmem:[%s256 + $0x28] sm:$0xff] %v543
        %552 = vst [vmem:[%s256 + $0x30] sm:$0xff] %v544
        %553 = vst [vmem:[%s256 + $0x38] sm:$0xff] %v545
        %v554 = vadd.f32 %v538, %v540
        %v555 = vadd.f32 %v554, %v542
        %v556 = vadd.f32 %v555, %v544
        %v557 = vrot.slane %v556, 4
        %v558 = vadd.f32 %v556, %v557
        %v559 = vrot.slane %v558, 2
        %v560 = vadd.f32 %v558, %v559
        %v561 = vrot.slane %v560, 1
        %v562 = vadd.f32 %v560, %v561
        %v563 = vadd.f32 %v539, %v541
        %v564 = vadd.f32 %v563, %v543
        %v565 = vadd.f32 %v564, %v545
        %v566 = vrot.slane %v565, 4
        %v567 = vadd.f32 %v565, %v566
        %v568 = vrot.slane %v567, 2
        %v569 = vadd.f32 %v567, %v568
        %v570 = vrot.slane %v569, 1
        %v571 = vadd.f32 %v569, %v570
        %v572 = vadd.f32 %v562, 0.0
        %v573 = vadd.f32 %v571, 0.0
        %v574 = vmax.f32 %v538, %v542
        %v575 = vmax.f32 %v540, %v544
        %v576 = vmax.f32 %v574, %v575
        %v577 = vrot.slane %v576, 4
        %v578 = vmax.f32 %v576, %v577
        %v579 = vrot.slane %v578, 2
        %v580 = vmax.f32 %v578, %v579
        %v581 = vrot.slane %v580, 1
        %v582 = vmax.f32 %v580, %v581
        %v583 = vmax.f32 %v539, %v543
        %v584 = vmax.f32 %v541, %v545
        %v585 = vmax.f32 %v583, %v584
        %v586 = vrot.slane %v585, 4
        %v587 = vmax.f32 %v585, %v586
        %v588 = vrot.slane %v587, 2
        %v589 = vmax.f32 %v587, %v588
        %v590 = vrot.slane %v589, 1
        %v591 = vmax.f32 %v589, %v590
        %v592 = vmul.f32 %v572, 0.03125
        %v593 = vmul.f32 %v573, 0.03125
        %v594 = vsel %vm349, %v592, %v582
        %v595 = vsel %vm349, %v593, %v591
        %v599 = vcombine.low 0.0, %v594
        %v600 = vcombine.low %v595, 0.0
        %v602 = vunpack.c.l.s4 1983009808
        %v603 = vunpack.c.0.s8 %v602
        %v604 = vlaneseq
        %v605 = vshrl.u32 %v604, 7
        %v606 = vsub.s32 %v603, %v605
        %v607 = vrot.slane %v599, %v606
        %v609 = vunpack.c.l.s4 1983009808
        %v610 = vunpack.c.0.s8 %v609
        %v611 = vlaneseq
        %v612 = vshrl.u32 %v611, 7
        %v613 = vsub.s32 %v610, %v612
        %v614 = vrot.slane %v600, %v613
        %v615 = vcombine.low %v607, %v614
        %617 = vst [vmem:[#allocation2] sm:$0xff] %v615
        %v618 = vld [vmem:[#allocation2] ss:$2 sm:$0x7]
        %s619 = scalar_lea.vmem [#allocation2], 2
        %v620 = vld [vmem:[%s619] ss:$2 sm:$0x3]
        %s621 = scalar_lea.vmem [#allocation2], 2
        %v622 = vld [vmem:[%s621] ss:$2 sm:$0x7]
        %s623 = scalar_lea.vmem [#allocation2], 1
        %v624 = vld [vmem:[%s623] ss:$2 sm:$0x7]
        %s625 = scalar_lea.vmem [#allocation2], 3
        %v626 = vld [vmem:[%s625] ss:$2 sm:$0x3]
        %s627 = scalar_lea.vmem [#allocation2], 3
        %v628 = vld [vmem:[%s627] ss:$2 sm:$0x7]
        %s629 = sld [smem:[#allocation7]]
        %v630 = vstv %s629
        %v631 = vmul.f32 %v630, %v618
        %s632 = sld [smem:[#allocation7 + $0x7]]
        %v633 = vstv %s632
        %v634 = vmul.f32 %v633, %v618
        %636 = vrot.lane.b32.xlu0 %v634, 112
        %v637 = vpop.permute.xlu0 %636
        %v638 = vrot.slane %v637, 1
        %vm639 = vcmask 916480
        %v640 = vsel %vm639, %v637, %v638
        %v642 = vadd.f32 %v631, %v640
        %s643 = sld [smem:[#allocation7 + $0xe]]
        %v644 = vstv %s643
        %v645 = vmul.f32 %v644, %v618
        %647 = vrot.lane.b32.xlu0 %v645, 96
        %v648 = vpop.permute.xlu0 %647
        %v649 = vrot.slane %v648, 1
        %vm650 = vcmask 785408
        %v651 = vsel %vm650, %v648, %v649
        %v653 = vadd.f32 %v642, %v651
        %s654 = sld [smem:[#allocation7 + $0x15]]
        %v655 = vstv %s654
        %v656 = vmul.f32 %v655, %v620
        %658 = vrot.lane.b32.xlu0 %v656, 80
        %v659 = vpop.permute.xlu0 %658
        %v660 = vrot.slane %v659, 7
        %vm661 = vcmask 654336
        %v662 = vsel %vm661, %v660, %v659
        %v664 = vadd.f32 %v653, %v662
        %s665 = sld [smem:[#allocation7 + $0x1c]]
        %v666 = vstv %s665
        %v667 = vmul.f32 %v666, %v622
        %669 = vrot.lane.b32.xlu0 %v667, 64
        %v670 = vpop.permute.xlu0 %669
        %v671 = vrot.slane %v670, 7
        %vm672 = vcmask 523264
        %v673 = vsel %vm672, %v671, %v670
        %v675 = vadd.f32 %v664, %v673
        %s676 = sld [smem:[#allocation7 + $0x23]]
        %v677 = vstv %s676
        %v678 = vmul.f32 %v677, %v622
        %680 = vrot.lane.b32.xlu0 %v678, 48
        %v681 = vpop.permute.xlu0 %680
        %v682 = vrot.slane %v681, 7
        %vm683 = vcmask 392192
        %v684 = vsel %vm683, %v682, %v681
        %v686 = vadd.f32 %v675, %v684
        %s687 = sld [smem:[#allocation7 + $0x2a]]
        %v688 = vstv %s687
        %v689 = vmul.f32 %v688, %v622
        %691 = vrot.lane.b32.xlu0 %v689, 32
        %v692 = vpop.permute.xlu0 %691
        %v693 = vrot.slane %v692, 7
        %v694 = vsel %vm355, %v693, %v692
        %v696 = vadd.f32 %v686, %v694
        %s697 = sld [smem:[#allocation7 + $0x31]]
        %v698 = vstv %s697
        %v699 = vmul.f32 %v698, %v624
        %v700 = vadd.f32 %v696, %v699
        %s701 = sld [smem:[#allocation7 + $0x38]]
        %v702 = vstv %s701
        %v703 = vmul.f32 %v702, %v624
        %705 = vrot.lane.b32.xlu0 %v703, 112
        %v706 = vpop.permute.xlu0 %705
        %v707 = vrot.slane %v706, 1
        %v708 = vsel %vm639, %v706, %v707
        %v710 = vadd.f32 %v700, %v708
        %s711 = sld [smem:[#allocation7 + $0x3f]]
        %v712 = vstv %s711
        %v713 = vmul.f32 %v712, %v624
        %715 = vrot.lane.b32.xlu0 %v713, 96
        %v716 = vpop.permute.xlu0 %715
        %v717 = vrot.slane %v716, 1
        %v718 = vsel %vm650, %v716, %v717
        %v720 = vadd.f32 %v710, %v718
        %s721 = sld [smem:[#allocation7 + $0x46]]
        %v722 = vstv %s721
        %v723 = vmul.f32 %v722, %v626
        %725 = vrot.lane.b32.xlu0 %v723, 80
        %v726 = vpop.permute.xlu0 %725
        %v727 = vrot.slane %v726, 7
        %v728 = vsel %vm661, %v727, %v726
        %v730 = vadd.f32 %v720, %v728
        %s731 = sld [smem:[#allocation7 + $0x4d]]
        %v732 = vstv %s731
        %v733 = vmul.f32 %v732, %v628
        %735 = vrot.lane.b32.xlu0 %v733, 64
        %v736 = vpop.permute.xlu0 %735
        %v737 = vrot.slane %v736, 7
        %v738 = vsel %vm672, %v737, %v736
        %v740 = vadd.f32 %v730, %v738
        %s741 = sld [smem:[#allocation7 + $0x54]]
        %v742 = vstv %s741
        %v743 = vmul.f32 %v742, %v628
        %745 = vrot.lane.b32.xlu0 %v743, 48
        %v746 = vpop.permute.xlu0 %745
        %v747 = vrot.slane %v746, 7
        %v748 = vsel %vm683, %v747, %v746
        %v750 = vadd.f32 %v740, %v748
        %s751 = sld [smem:[#allocation7 + $0x5b]]
        %v752 = vstv %s751
        %v753 = vmul.f32 %v752, %v628
        %755 = vrot.lane.b32.xlu0 %v753, 32
        %v756 = vpop.permute.xlu0 %755
        %v757 = vrot.slane %v756, 7
        %v758 = vsel %vm355, %v757, %v756
        %v760 = vadd.f32 %v750, %v758
        %v762 = vlaneseq
        %v763 = vshrl.u32 %v762, 7
        %v764 = vsub.s32 2, %v763
        %v765 = vrot.slane %v760, %v764
        %766 = vrot.lane.b32.xlu0 %v765, 51
        %v767 = vpop.permute.xlu0 %766
        %v769 = vlaneseq
        %v770 = vshrl.u32 %v769, 7
        %v771 = vsub.s32 0, %v770
        %v772 = vrot.slane %v760, %v771
        %v773 = vlaneseq
        %v774 = vshrl.u32 %v773, 7
        %v775 = vsub.s32 1, %v774
        %v776 = vrot.slane %v760, %v775
        %777 = vrot.lane.b32.xlu0 %v772, 51
        %v778 = vpop.permute.xlu0 %777
        %779 = vrot.lane.b32.xlu0 %v776, 51
        %v780 = vpop.permute.xlu0 %779
        %vm781 = vcmask 416768
        %v782 = vsel %vm781, %v778, %v780
        %v783 = vsel %vm781, %v780, %v767
        %vm786 = vcmask 23552
        %v787 = vsel %vm786, %v767, %v782
        %v788 = vld [vmem:[%s4] ss:$8 sm:$0x3]
        %v790 = vlaneseq
        %v791 = vshrl.u32 %v790, 7
        %v792 = vsub.s32 0, %v791
        %v793 = vrot.slane %v788, %v792
        %v794 = vlaneseq
        %v795 = vshrl.u32 %v794, 7
        %v796 = vsub.s32 1, %v795
        %v797 = vrot.slane %v788, %v796
        %v800 = vmul.f32 %v787, %v793
        %v801 = vmul.f32 %v783, %v797
        %s802 = sld [smem:[#allocation7 + $0x1]]
        %v803 = vstv %s802
        %v804 = vmul.f32 %v803, %v618
        %s805 = sld [smem:[#allocation7 + $0x8]]
        %v806 = vstv %s805
        %v807 = vmul.f32 %v806, %v618
        %809 = vrot.lane.b32.xlu0 %v807, 112
        %v810 = vpop.permute.xlu0 %809
        %v811 = vrot.slane %v810, 1
        %v812 = vsel %vm639, %v810, %v811
        %v814 = vadd.f32 %v804, %v812
        %s815 = sld [smem:[#allocation7 + $0xf]]
        %v816 = vstv %s815
        %v817 = vmul.f32 %v816, %v618
        %819 = vrot.lane.b32.xlu0 %v817, 96
        %v820 = vpop.permute.xlu0 %819
        %v821 = vrot.slane %v820, 1
        %v822 = vsel %vm650, %v820, %v821
        %v824 = vadd.f32 %v814, %v822
        %s825 = sld [smem:[#allocation7 + $0x16]]
        %v826 = vstv %s825
        %v827 = vmul.f32 %v826, %v620
        %829 = vrot.lane.b32.xlu0 %v827, 80
        %v830 = vpop.permute.xlu0 %829
        %v831 = vrot.slane %v830, 7
        %v832 = vsel %vm661, %v831, %v830
        %v834 = vadd.f32 %v824, %v832
        %s835 = sld [smem:[#allocation7 + $0x1d]]
        %v836 = vstv %s835
        %v837 = vmul.f32 %v836, %v622
        %839 = vrot.lane.b32.xlu0 %v837, 64
        %v840 = vpop.permute.xlu0 %839
        %v841 = vrot.slane %v840, 7
        %v842 = vsel %vm672, %v841, %v840
        %v844 = vadd.f32 %v834, %v842
        %s845 = sld [smem:[#allocation7 + $0x24]]
        %v846 = vstv %s845
        %v847 = vmul.f32 %v846, %v622
        %849 = vrot.lane.b32.xlu0 %v847, 48
        %v850 = vpop.permute.xlu0 %849
        %v851 = vrot.slane %v850, 7
        %v852 = vsel %vm683, %v851, %v850
        %v854 = vadd.f32 %v844, %v852
        %s855 = sld [smem:[#allocation7 + $0x2b]]
        %v856 = vstv %s855
        %v857 = vmul.f32 %v856, %v622
        %859 = vrot.lane.b32.xlu0 %v857, 32
        %v860 = vpop.permute.xlu0 %859
        %v861 = vrot.slane %v860, 7
        %v862 = vsel %vm355, %v861, %v860
        %v864 = vadd.f32 %v854, %v862
        %s865 = sld [smem:[#allocation7 + $0x32]]
        %v866 = vstv %s865
        %v867 = vmul.f32 %v866, %v624
        %v868 = vadd.f32 %v864, %v867
        %s869 = sld [smem:[#allocation7 + $0x39]]
        %v870 = vstv %s869
        %v871 = vmul.f32 %v870, %v624
        %873 = vrot.lane.b32.xlu0 %v871, 112
        %v874 = vpop.permute.xlu0 %873
        %v875 = vrot.slane %v874, 1
        %v876 = vsel %vm639, %v874, %v875
        %v878 = vadd.f32 %v868, %v876
        %s879 = sld [smem:[#allocation7 + $0x40]]
        %v880 = vstv %s879
        %v881 = vmul.f32 %v880, %v624
        %883 = vrot.lane.b32.xlu0 %v881, 96
        %v884 = vpop.permute.xlu0 %883
        %v885 = vrot.slane %v884, 1
        %v886 = vsel %vm650, %v884, %v885
        %v888 = vadd.f32 %v878, %v886
        %s889 = sld [smem:[#allocation7 + $0x47]]
        %v890 = vstv %s889
        %v891 = vmul.f32 %v890, %v626
        %893 = vrot.lane.b32.xlu0 %v891, 80
        %v894 = vpop.permute.xlu0 %893
        %v895 = vrot.slane %v894, 7
        %v896 = vsel %vm661, %v895, %v894
        %v898 = vadd.f32 %v888, %v896
        %s899 = sld [smem:[#allocation7 + $0x4e]]
        %v900 = vstv %s899
        %v901 = vmul.f32 %v900, %v628
        %903 = vrot.lane.b32.xlu0 %v901, 64
        %v904 = vpop.permute.xlu0 %903
        %v905 = vrot.slane %v904, 7
        %v906 = vsel %vm672, %v905, %v904
        %v908 = vadd.f32 %v898, %v906
        %s909 = sld [smem:[#allocation7 + $0x55]]
        %v910 = vstv %s909
        %v911 = vmul.f32 %v910, %v628
        %913 = vrot.lane.b32.xlu0 %v911, 48
        %v914 = vpop.permute.xlu0 %913
        %v915 = vrot.slane %v914, 7
        %v916 = vsel %vm683, %v915, %v914
        %v918 = vadd.f32 %v908, %v916
        %s919 = sld [smem:[#allocation7 + $0x5c]]
        %v920 = vstv %s919
        %v921 = vmul.f32 %v920, %v628
        %923 = vrot.lane.b32.xlu0 %v921, 32
        %v924 = vpop.permute.xlu0 %923
        %v925 = vrot.slane %v924, 7
        %v926 = vsel %vm355, %v925, %v924
        %v928 = vadd.f32 %v918, %v926
        %v930 = vlaneseq
        %v931 = vshrl.u32 %v930, 7
        %v932 = vsub.s32 2, %v931
        %v933 = vrot.slane %v928, %v932
        %934 = vrot.lane.b32.xlu0 %v933, 50
        %v935 = vpop.permute.xlu0 %934
        %v937 = vlaneseq
        %v938 = vshrl.u32 %v937, 7
        %v939 = vsub.s32 0, %v938
        %v940 = vrot.slane %v928, %v939
        %v941 = vlaneseq
        %v942 = vshrl.u32 %v941, 7
        %v943 = vsub.s32 1, %v942
        %v944 = vrot.slane %v928, %v943
        %945 = vrot.lane.b32.xlu0 %v940, 50
        %v946 = vpop.permute.xlu0 %945
        %947 = vrot.lane.b32.xlu0 %v944, 50
        %v948 = vpop.permute.xlu0 %947
        %vm949 = vcmask 408576
        %v950 = vsel %vm949, %v946, %v948
        %v951 = vsel %vm949, %v948, %v935
        %v954 = vsel %vm431, %v935, %v950
        %s955 = scalar_lea.vmem %s4, 1
        %v956 = vld [vmem:[%s955] ss:$8 sm:$0x3]
        %v958 = vlaneseq
        %v959 = vshrl.u32 %v958, 7
        %v960 = vsub.s32 0, %v959
        %v961 = vrot.slane %v956, %v960
        %v962 = vlaneseq
        %v963 = vshrl.u32 %v962, 7
        %v964 = vsub.s32 1, %v963
        %v965 = vrot.slane %v956, %v964
        %v968 = vmul.f32 %v954, %v961
        %v969 = vmul.f32 %v951, %v965
        %v970 = vadd.f32 %v800, %v968
        %v971 = vadd.f32 %v801, %v969
        %s972 = sld [smem:[#allocation7 + $0x2]]
        %v973 = vstv %s972
        %v974 = vmul.f32 %v973, %v618
        %s975 = sld [smem:[#allocation7 + $0x9]]
        %v976 = vstv %s975
        %v977 = vmul.f32 %v976, %v618
        %979 = vrot.lane.b32.xlu0 %v977, 112
        %v980 = vpop.permute.xlu0 %979
        %v981 = vrot.slane %v980, 1
        %v982 = vsel %vm639, %v980, %v981
        %v984 = vadd.f32 %v974, %v982
        %s985 = sld [smem:[#allocation7 + $0x10]]
        %v986 = vstv %s985
        %v987 = vmul.f32 %v986, %v618
        %989 = vrot.lane.b32.xlu0 %v987, 96
        %v990 = vpop.permute.xlu0 %989
        %v991 = vrot.slane %v990, 1
        %v992 = vsel %vm650, %v990, %v991
        %v994 = vadd.f32 %v984, %v992
        %s995 = sld [smem:[#allocation7 + $0x17]]
        %v996 = vstv %s995
        %v997 = vmul.f32 %v996, %v620
        %999 = vrot.lane.b32.xlu0 %v997, 80
        %v1000 = vpop.permute.xlu0 %999
        %v1001 = vrot.slane %v1000, 7
        %v1002 = vsel %vm661, %v1001, %v1000
        %v1004 = vadd.f32 %v994, %v1002
        %s1005 = sld [smem:[#allocation7 + $0x1e]]
        %v1006 = vstv %s1005
        %v1007 = vmul.f32 %v1006, %v622
        %1009 = vrot.lane.b32.xlu0 %v1007, 64
        %v1010 = vpop.permute.xlu0 %1009
        %v1011 = vrot.slane %v1010, 7
        %v1012 = vsel %vm672, %v1011, %v1010
        %v1014 = vadd.f32 %v1004, %v1012
        %s1015 = sld [smem:[#allocation7 + $0x25]]
        %v1016 = vstv %s1015
        %v1017 = vmul.f32 %v1016, %v622
        %1019 = vrot.lane.b32.xlu0 %v1017, 48
        %v1020 = vpop.permute.xlu0 %1019
        %v1021 = vrot.slane %v1020, 7
        %v1022 = vsel %vm683, %v1021, %v1020
        %v1024 = vadd.f32 %v1014, %v1022
        %s1025 = sld [smem:[#allocation7 + $0x2c]]
        %v1026 = vstv %s1025
        %v1027 = vmul.f32 %v1026, %v622
        %1029 = vrot.lane.b32.xlu0 %v1027, 32
        %v1030 = vpop.permute.xlu0 %1029
        %v1031 = vrot.slane %v1030, 7
        %v1032 = vsel %vm355, %v1031, %v1030
        %v1034 = vadd.f32 %v1024, %v1032
        %s1035 = sld [smem:[#allocation7 + $0x33]]
        %v1036 = vstv %s1035
        %v1037 = vmul.f32 %v1036, %v624
        %v1038 = vadd.f32 %v1034, %v1037
        %s1039 = sld [smem:[#allocation7 + $0x3a]]
        %v1040 = vstv %s1039
        %v1041 = vmul.f32 %v1040, %v624
        %1043 = vrot.lane.b32.xlu0 %v1041, 112
        %v1044 = vpop.permute.xlu0 %1043
        %v1045 = vrot.slane %v1044, 1
        %v1046 = vsel %vm639, %v1044, %v1045
        %v1048 = vadd.f32 %v1038, %v1046
        %s1049 = sld [smem:[#allocation7 + $0x41]]
        %v1050 = vstv %s1049
        %v1051 = vmul.f32 %v1050, %v624
        %1053 = vrot.lane.b32.xlu0 %v1051, 96
        %v1054 = vpop.permute.xlu0 %1053
        %v1055 = vrot.slane %v1054, 1
        %v1056 = vsel %vm650, %v1054, %v1055
        %v1058 = vadd.f32 %v1048, %v1056
        %s1059 = sld [smem:[#allocation7 + $0x48]]
        %v1060 = vstv %s1059
        %v1061 = vmul.f32 %v1060, %v626
        %1063 = vrot.lane.b32.xlu0 %v1061, 80
        %v1064 = vpop.permute.xlu0 %1063
        %v1065 = vrot.slane %v1064, 7
        %v1066 = vsel %vm661, %v1065, %v1064
        %v1068 = vadd.f32 %v1058, %v1066
        %s1069 = sld [smem:[#allocation7 + $0x4f]]
        %v1070 = vstv %s1069
        %v1071 = vmul.f32 %v1070, %v628
        %1073 = vrot.lane.b32.xlu0 %v1071, 64
        %v1074 = vpop.permute.xlu0 %1073
        %v1075 = vrot.slane %v1074, 7
        %v1076 = vsel %vm672, %v1075, %v1074
        %v1078 = vadd.f32 %v1068, %v1076
        %s1079 = sld [smem:[#allocation7 + $0x56]]
        %v1080 = vstv %s1079
        %v1081 = vmul.f32 %v1080, %v628
        %1083 = vrot.lane.b32.xlu0 %v1081, 48
        %v1084 = vpop.permute.xlu0 %1083
        %v1085 = vrot.slane %v1084, 7
        %v1086 = vsel %vm683, %v1085, %v1084
        %v1088 = vadd.f32 %v1078, %v1086
        %s1089 = sld [smem:[#allocation7 + $0x5d]]
        %v1090 = vstv %s1089
        %v1091 = vmul.f32 %v1090, %v628
        %1093 = vrot.lane.b32.xlu0 %v1091, 32
        %v1094 = vpop.permute.xlu0 %1093
        %v1095 = vrot.slane %v1094, 7
        %v1096 = vsel %vm355, %v1095, %v1094
        %v1098 = vadd.f32 %v1088, %v1096
        %v1100 = vlaneseq
        %v1101 = vshrl.u32 %v1100, 7
        %v1102 = vsub.s32 2, %v1101
        %v1103 = vrot.slane %v1098, %v1102
        %1104 = vrot.lane.b32.xlu0 %v1103, 49
        %v1105 = vpop.permute.xlu0 %1104
        %v1107 = vlaneseq
        %v1108 = vshrl.u32 %v1107, 7
        %v1109 = vsub.s32 0, %v1108
        %v1110 = vrot.slane %v1098, %v1109
        %v1111 = vlaneseq
        %v1112 = vshrl.u32 %v1111, 7
        %v1113 = vsub.s32 1, %v1112
        %v1114 = vrot.slane %v1098, %v1113
        %1115 = vrot.lane.b32.xlu0 %v1110, 49
        %v1116 = vpop.permute.xlu0 %1115
        %1117 = vrot.lane.b32.xlu0 %v1114, 49
        %v1118 = vpop.permute.xlu0 %1117
        %vm1119 = vcmask 400384
        %v1120 = vsel %vm1119, %v1116, %v1118
        %v1121 = vsel %vm1119, %v1118, %v1105
        %vm1124 = vcmask 7168
        %v1125 = vsel %vm1124, %v1105, %v1120
        %s1126 = scalar_lea.vmem %s4, 2
        %v1127 = vld [vmem:[%s1126] ss:$8 sm:$0x3]
        %v1129 = vlaneseq
        %v1130 = vshrl.u32 %v1129, 7
        %v1131 = vsub.s32 0, %v1130
        %v1132 = vrot.slane %v1127, %v1131
        %v1133 = vlaneseq
        %v1134 = vshrl.u32 %v1133, 7
        %v1135 = vsub.s32 1, %v1134
        %v1136 = vrot.slane %v1127, %v1135
        %v1139 = vmul.f32 %v1125, %v1132
        %v1140 = vmul.f32 %v1121, %v1136
        %v1141 = vadd.f32 %v970, %v1139
        %v1142 = vadd.f32 %v971, %v1140
        %s1143 = sld [smem:[#allocation7 + $0x3]]
        %v1144 = vstv %s1143
        %v1145 = vmul.f32 %v1144, %v618
        %s1146 = sld [smem:[#allocation7 + $0xa]]
        %v1147 = vstv %s1146
        %v1148 = vmul.f32 %v1147, %v618
        %1150 = vrot.lane.b32.xlu0 %v1148, 112
        %v1151 = vpop.permute.xlu0 %1150
        %v1152 = vrot.slane %v1151, 1
        %v1153 = vsel %vm639, %v1151, %v1152
        %v1155 = vadd.f32 %v1145, %v1153
        %s1156 = sld [smem:[#allocation7 + $0x11]]
        %v1157 = vstv %s1156
        %v1158 = vmul.f32 %v1157, %v618
        %1160 = vrot.lane.b32.xlu0 %v1158, 96
        %v1161 = vpop.permute.xlu0 %1160
        %v1162 = vrot.slane %v1161, 1
        %v1163 = vsel %vm650, %v1161, %v1162
        %v1165 = vadd.f32 %v1155, %v1163
        %s1166 = sld [smem:[#allocation7 + $0x18]]
        %v1167 = vstv %s1166
        %v1168 = vmul.f32 %v1167, %v620
        %1170 = vrot.lane.b32.xlu0 %v1168, 80
        %v1171 = vpop.permute.xlu0 %1170
        %v1172 = vrot.slane %v1171, 7
        %v1173 = vsel %vm661, %v1172, %v1171
        %v1175 = vadd.f32 %v1165, %v1173
        %s1176 = sld [smem:[#allocation7 + $0x1f]]
        %v1177 = vstv %s1176
        %v1178 = vmul.f32 %v1177, %v622
        %1180 = vrot.lane.b32.xlu0 %v1178, 64
        %v1181 = vpop.permute.xlu0 %1180
        %v1182 = vrot.slane %v1181, 7
        %v1183 = vsel %vm672, %v1182, %v1181
        %v1185 = vadd.f32 %v1175, %v1183
        %s1186 = sld [smem:[#allocation7 + $0x26]]
        %v1187 = vstv %s1186
        %v1188 = vmul.f32 %v1187, %v622
        %1190 = vrot.lane.b32.xlu0 %v1188, 48
        %v1191 = vpop.permute.xlu0 %1190
        %v1192 = vrot.slane %v1191, 7
        %v1193 = vsel %vm683, %v1192, %v1191
        %v1195 = vadd.f32 %v1185, %v1193
        %s1196 = sld [smem:[#allocation7 + $0x2d]]
        %v1197 = vstv %s1196
        %v1198 = vmul.f32 %v1197, %v622
        %1200 = vrot.lane.b32.xlu0 %v1198, 32
        %v1201 = vpop.permute.xlu0 %1200
        %v1202 = vrot.slane %v1201, 7
        %v1203 = vsel %vm355, %v1202, %v1201
        %v1205 = vadd.f32 %v1195, %v1203
        %s1206 = sld [smem:[#allocation7 + $0x34]]
        %v1207 = vstv %s1206
        %v1208 = vmul.f32 %v1207, %v624
        %v1209 = vadd.f32 %v1205, %v1208
        %s1210 = sld [smem:[#allocation7 + $0x3b]]
        %v1211 = vstv %s1210
        %v1212 = vmul.f32 %v1211, %v624
        %1214 = vrot.lane.b32.xlu0 %v1212, 112
        %v1215 = vpop.permute.xlu0 %1214
        %v1216 = vrot.slane %v1215, 1
        %v1217 = vsel %vm639, %v1215, %v1216
        %v1219 = vadd.f32 %v1209, %v1217
        %s1220 = sld [smem:[#allocation7 + $0x42]]
        %v1221 = vstv %s1220
        %v1222 = vmul.f32 %v1221, %v624
        %1224 = vrot.lane.b32.xlu0 %v1222, 96
        %v1225 = vpop.permute.xlu0 %1224
        %v1226 = vrot.slane %v1225, 1
        %v1227 = vsel %vm650, %v1225, %v1226
        %v1229 = vadd.f32 %v1219, %v1227
        %s1230 = sld [smem:[#allocation7 + $0x49]]
        %v1231 = vstv %s1230
        %v1232 = vmul.f32 %v1231, %v626
        %1234 = vrot.lane.b32.xlu0 %v1232, 80
        %v1235 = vpop.permute.xlu0 %1234
        %v1236 = vrot.slane %v1235, 7
        %v1237 = vsel %vm661, %v1236, %v1235
        %v1239 = vadd.f32 %v1229, %v1237
        %s1240 = sld [smem:[#allocation7 + $0x50]]
        %v1241 = vstv %s1240
        %v1242 = vmul.f32 %v1241, %v628
        %1244 = vrot.lane.b32.xlu0 %v1242, 64
        %v1245 = vpop.permute.xlu0 %1244
        %v1246 = vrot.slane %v1245, 7
        %v1247 = vsel %vm672, %v1246, %v1245
        %v1249 = vadd.f32 %v1239, %v1247
        %s1250 = sld [smem:[#allocation7 + $0x57]]
        %v1251 = vstv %s1250
        %v1252 = vmul.f32 %v1251, %v628
        %1254 = vrot.lane.b32.xlu0 %v1252, 48
        %v1255 = vpop.permute.xlu0 %1254
        %v1256 = vrot.slane %v1255, 7
        %v1257 = vsel %vm683, %v1256, %v1255
        %v1259 = vadd.f32 %v1249, %v1257
        %s1260 = sld [smem:[#allocation7 + $0x5e]]
        %v1261 = vstv %s1260
        %v1262 = vmul.f32 %v1261, %v628
        %1264 = vrot.lane.b32.xlu0 %v1262, 32
        %v1265 = vpop.permute.xlu0 %1264
        %v1266 = vrot.slane %v1265, 7
        %v1267 = vsel %vm355, %v1266, %v1265
        %v1269 = vadd.f32 %v1259, %v1267
        %v1271 = vlaneseq
        %v1272 = vshrl.u32 %v1271, 7
        %v1273 = vsub.s32 0, %v1272
        %v1274 = vrot.slane %v1269, %v1273
        %v1275 = vlaneseq
        %v1276 = vshrl.u32 %v1275, 7
        %v1277 = vsub.s32 1, %v1276
        %v1278 = vrot.slane %v1269, %v1277
        %v1279 = vlaneseq
        %v1280 = vshrl.u32 %v1279, 7
        %v1281 = vsub.s32 2, %v1280
        %v1282 = vrot.slane %v1269, %v1281
        %1283 = vrot.lane.b32.xlu0 %v1274, 48
        %v1284 = vpop.permute.xlu0 %1283
        %1285 = vrot.lane.b32.xlu0 %v1278, 48
        %v1286 = vpop.permute.xlu0 %1285
        %1287 = vrot.lane.b32.xlu0 %v1282, 48
        %v1288 = vpop.permute.xlu0 %1287
        %v1289 = vsel %vm683, %v1284, %v1286
        %v1290 = vsel %vm683, %v1286, %v1288
        %v1293 = vadd.f32 %v1141, %v1289
        %v1294 = vadd.f32 %v1142, %v1290
        %s1295 = sld [smem:[#allocation7 + $0x4]]
        %v1296 = vstv %s1295
        %v1297 = vmul.f32 %v1296, %v618
        %s1298 = sld [smem:[#allocation7 + $0xb]]
        %v1299 = vstv %s1298
        %v1300 = vmul.f32 %v1299, %v618
        %1302 = vrot.lane.b32.xlu0 %v1300, 112
        %v1303 = vpop.permute.xlu0 %1302
        %v1304 = vrot.slane %v1303, 1
        %v1305 = vsel %vm639, %v1303, %v1304
        %v1307 = vadd.f32 %v1297, %v1305
        %s1308 = sld [smem:[#allocation7 + $0x12]]
        %v1309 = vstv %s1308
        %v1310 = vmul.f32 %v1309, %v618
        %1312 = vrot.lane.b32.xlu0 %v1310, 96
        %v1313 = vpop.permute.xlu0 %1312
        %v1314 = vrot.slane %v1313, 1
        %v1315 = vsel %vm650, %v1313, %v1314
        %v1317 = vadd.f32 %v1307, %v1315
        %s1318 = sld [smem:[#allocation7 + $0x19]]
        %v1319 = vstv %s1318
        %v1320 = vmul.f32 %v1319, %v620
        %1322 = vrot.lane.b32.xlu0 %v1320, 80
        %v1323 = vpop.permute.xlu0 %1322
        %v1324 = vrot.slane %v1323, 7
        %v1325 = vsel %vm661, %v1324, %v1323
        %v1327 = vadd.f32 %v1317, %v1325
        %s1328 = sld [smem:[#allocation7 + $0x20]]
        %v1329 = vstv %s1328
        %v1330 = vmul.f32 %v1329, %v622
        %1332 = vrot.lane.b32.xlu0 %v1330, 64
        %v1333 = vpop.permute.xlu0 %1332
        %v1334 = vrot.slane %v1333, 7
        %v1335 = vsel %vm672, %v1334, %v1333
        %v1337 = vadd.f32 %v1327, %v1335
        %s1338 = sld [smem:[#allocation7 + $0x27]]
        %v1339 = vstv %s1338
        %v1340 = vmul.f32 %v1339, %v622
        %1342 = vrot.lane.b32.xlu0 %v1340, 48
        %v1343 = vpop.permute.xlu0 %1342
        %v1344 = vrot.slane %v1343, 7
        %v1345 = vsel %vm683, %v1344, %v1343
        %v1347 = vadd.f32 %v1337, %v1345
        %s1348 = sld [smem:[#allocation7 + $0x2e]]
        %v1349 = vstv %s1348
        %v1350 = vmul.f32 %v1349, %v622
        %1352 = vrot.lane.b32.xlu0 %v1350, 32
        %v1353 = vpop.permute.xlu0 %1352
        %v1354 = vrot.slane %v1353, 7
        %v1355 = vsel %vm355, %v1354, %v1353
        %v1357 = vadd.f32 %v1347, %v1355
        %s1358 = sld [smem:[#allocation7 + $0x35]]
        %v1359 = vstv %s1358
        %v1360 = vmul.f32 %v1359, %v624
        %v1361 = vadd.f32 %v1357, %v1360
        %s1362 = sld [smem:[#allocation7 + $0x3c]]
        %v1363 = vstv %s1362
        %v1364 = vmul.f32 %v1363, %v624
        %1366 = vrot.lane.b32.xlu0 %v1364, 112
        %v1367 = vpop.permute.xlu0 %1366
        %v1368 = vrot.slane %v1367, 1
        %v1369 = vsel %vm639, %v1367, %v1368
        %v1371 = vadd.f32 %v1361, %v1369
        %s1372 = sld [smem:[#allocation7 + $0x43]]
        %v1373 = vstv %s1372
        %v1374 = vmul.f32 %v1373, %v624
        %1376 = vrot.lane.b32.xlu0 %v1374, 96
        %v1377 = vpop.permute.xlu0 %1376
        %v1378 = vrot.slane %v1377, 1
        %v1379 = vsel %vm650, %v1377, %v1378
        %v1381 = vadd.f32 %v1371, %v1379
        %s1382 = sld [smem:[#allocation7 + $0x4a]]
        %v1383 = vstv %s1382
        %v1384 = vmul.f32 %v1383, %v626
        %1386 = vrot.lane.b32.xlu0 %v1384, 80
        %v1387 = vpop.permute.xlu0 %1386
        %v1388 = vrot.slane %v1387, 7
        %v1389 = vsel %vm661, %v1388, %v1387
        %v1391 = vadd.f32 %v1381, %v1389
        %s1392 = sld [smem:[#allocation7 + $0x51]]
        %v1393 = vstv %s1392
        %v1394 = vmul.f32 %v1393, %v628
        %1396 = vrot.lane.b32.xlu0 %v1394, 64
        %v1397 = vpop.permute.xlu0 %1396
        %v1398 = vrot.slane %v1397, 7
        %v1399 = vsel %vm672, %v1398, %v1397
        %v1401 = vadd.f32 %v1391, %v1399
        %s1402 = sld [smem:[#allocation7 + $0x58]]
        %v1403 = vstv %s1402
        %v1404 = vmul.f32 %v1403, %v628
        %1406 = vrot.lane.b32.xlu0 %v1404, 48
        %v1407 = vpop.permute.xlu0 %1406
        %v1408 = vrot.slane %v1407, 7
        %v1409 = vsel %vm683, %v1408, %v1407
        %v1411 = vadd.f32 %v1401, %v1409
        %s1412 = sld [smem:[#allocation7 + $0x5f]]
        %v1413 = vstv %s1412
        %v1414 = vmul.f32 %v1413, %v628
        %1416 = vrot.lane.b32.xlu0 %v1414, 32
        %v1417 = vpop.permute.xlu0 %1416
        %v1418 = vrot.slane %v1417, 7
        %v1419 = vsel %vm355, %v1418, %v1417
        %v1421 = vadd.f32 %v1411, %v1419
        %v1423 = vlaneseq
        %v1424 = vshrl.u32 %v1423, 7
        %v1425 = vsub.s32 0, %v1424
        %v1426 = vrot.slane %v1421, %v1425
        %v1427 = vlaneseq
        %v1428 = vshrl.u32 %v1427, 7
        %v1429 = vsub.s32 1, %v1428
        %v1430 = vrot.slane %v1421, %v1429
        %v1431 = vlaneseq
        %v1432 = vshrl.u32 %v1431, 7
        %v1433 = vsub.s32 2, %v1432
        %v1434 = vrot.slane %v1421, %v1433
        %1435 = vrot.lane.b32.xlu0 %v1426, 47
        %v1436 = vpop.permute.xlu0 %1435
        %1437 = vrot.lane.b32.xlu0 %v1430, 47
        %v1438 = vpop.permute.xlu0 %1437
        %1439 = vrot.lane.b32.xlu0 %v1434, 47
        %v1440 = vpop.permute.xlu0 %1439
        %vm1441 = vcmask 384000
        %v1442 = vsel %vm1441, %v1436, %v1438
        %v1443 = vsel %vm1441, %v1438, %v1440
        %vm1447 = vcmask 1039360
        %v1448 = vsel %vm1447, %v1443, %v1436
        %s1449 = scalar_lea.vmem %s4, 4
        %v1450 = vld [vmem:[%s1449] ss:$8 sm:$0x3]
        %v1452 = vlaneseq
        %v1453 = vshrl.u32 %v1452, 7
        %v1454 = vsub.s32 0, %v1453
        %v1455 = vrot.slane %v1450, %v1454
        %v1456 = vlaneseq
        %v1457 = vshrl.u32 %v1456, 7
        %v1458 = vsub.s32 1, %v1457
        %v1459 = vrot.slane %v1450, %v1458
        %v1462 = vmul.f32 %v1442, %v1455
        %v1463 = vmul.f32 %v1448, %v1459
        %v1464 = vadd.f32 %v1293, %v1462
        %v1465 = vadd.f32 %v1294, %v1463
        %s1466 = sld [smem:[#allocation7 + $0x5]]
        %v1467 = vstv %s1466
        %v1468 = vmul.f32 %v1467, %v618
        %s1469 = sld [smem:[#allocation7 + $0xc]]
        %v1470 = vstv %s1469
        %v1471 = vmul.f32 %v1470, %v618
        %1473 = vrot.lane.b32.xlu0 %v1471, 112
        %v1474 = vpop.permute.xlu0 %1473
        %v1475 = vrot.slane %v1474, 1
        %v1476 = vsel %vm639, %v1474, %v1475
        %v1478 = vadd.f32 %v1468, %v1476
        %s1479 = sld [smem:[#allocation7 + $0x13]]
        %v1480 = vstv %s1479
        %v1481 = vmul.f32 %v1480, %v618
        %1483 = vrot.lane.b32.xlu0 %v1481, 96
        %v1484 = vpop.permute.xlu0 %1483
        %v1485 = vrot.slane %v1484, 1
        %v1486 = vsel %vm650, %v1484, %v1485
        %v1488 = vadd.f32 %v1478, %v1486
        %s1489 = sld [smem:[#allocation7 + $0x1a]]
        %v1490 = vstv %s1489
        %v1491 = vmul.f32 %v1490, %v620
        %1493 = vrot.lane.b32.xlu0 %v1491, 80
        %v1494 = vpop.permute.xlu0 %1493
        %v1495 = vrot.slane %v1494, 7
        %v1496 = vsel %vm661, %v1495, %v1494
        %v1498 = vadd.f32 %v1488, %v1496
        %s1499 = sld [smem:[#allocation7 + $0x21]]
        %v1500 = vstv %s1499
        %v1501 = vmul.f32 %v1500, %v622
        %1503 = vrot.lane.b32.xlu0 %v1501, 64
        %v1504 = vpop.permute.xlu0 %1503
        %v1505 = vrot.slane %v1504, 7
        %v1506 = vsel %vm672, %v1505, %v1504
        %v1508 = vadd.f32 %v1498, %v1506
        %s1509 = sld [smem:[#allocation7 + $0x28]]
        %v1510 = vstv %s1509
        %v1511 = vmul.f32 %v1510, %v622
        %1513 = vrot.lane.b32.xlu0 %v1511, 48
        %v1514 = vpop.permute.xlu0 %1513
        %v1515 = vrot.slane %v1514, 7
        %v1516 = vsel %vm683, %v1515, %v1514
        %v1518 = vadd.f32 %v1508, %v1516
        %s1519 = sld [smem:[#allocation7 + $0x2f]]
        %v1520 = vstv %s1519
        %v1521 = vmul.f32 %v1520, %v622
        %1523 = vrot.lane.b32.xlu0 %v1521, 32
        %v1524 = vpop.permute.xlu0 %1523
        %v1525 = vrot.slane %v1524, 7
        %v1526 = vsel %vm355, %v1525, %v1524
        %v1528 = vadd.f32 %v1518, %v1526
        %s1529 = sld [smem:[#allocation7 + $0x36]]
        %v1530 = vstv %s1529
        %v1531 = vmul.f32 %v1530, %v624
        %v1532 = vadd.f32 %v1528, %v1531
        %s1533 = sld [smem:[#allocation7 + $0x3d]]
        %v1534 = vstv %s1533
        %v1535 = vmul.f32 %v1534, %v624
        %1537 = vrot.lane.b32.xlu0 %v1535, 112
        %v1538 = vpop.permute.xlu0 %1537
        %v1539 = vrot.slane %v1538, 1
        %v1540 = vsel %vm639, %v1538, %v1539
        %v1542 = vadd.f32 %v1532, %v1540
        %s1543 = sld [smem:[#allocation7 + $0x44]]
        %v1544 = vstv %s1543
        %v1545 = vmul.f32 %v1544, %v624
        %1547 = vrot.lane.b32.xlu0 %v1545, 96
        %v1548 = vpop.permute.xlu0 %1547
        %v1549 = vrot.slane %v1548, 1
        %v1550 = vsel %vm650, %v1548, %v1549
        %v1552 = vadd.f32 %v1542, %v1550
        %s1553 = sld [smem:[#allocation7 + $0x4b]]
        %v1554 = vstv %s1553
        %v1555 = vmul.f32 %v1554, %v626
        %1557 = vrot.lane.b32.xlu0 %v1555, 80
        %v1558 = vpop.permute.xlu0 %1557
        %v1559 = vrot.slane %v1558, 7
        %v1560 = vsel %vm661, %v1559, %v1558
        %v1562 = vadd.f32 %v1552, %v1560
        %s1563 = sld [smem:[#allocation7 + $0x52]]
        %v1564 = vstv %s1563
        %v1565 = vmul.f32 %v1564, %v628
        %1567 = vrot.lane.b32.xlu0 %v1565, 64
        %v1568 = vpop.permute.xlu0 %1567
        %v1569 = vrot.slane %v1568, 7
        %v1570 = vsel %vm672, %v1569, %v1568
        %v1572 = vadd.f32 %v1562, %v1570
        %s1573 = sld [smem:[#allocation7 + $0x59]]
        %v1574 = vstv %s1573
        %v1575 = vmul.f32 %v1574, %v628
        %1577 = vrot.lane.b32.xlu0 %v1575, 48
        %v1578 = vpop.permute.xlu0 %1577
        %v1579 = vrot.slane %v1578, 7
        %v1580 = vsel %vm683, %v1579, %v1578
        %v1582 = vadd.f32 %v1572, %v1580
        %s1583 = sld [smem:[#allocation7 + $0x60]]
        %v1584 = vstv %s1583
        %v1585 = vmul.f32 %v1584, %v628
        %1587 = vrot.lane.b32.xlu0 %v1585, 32
        %v1588 = vpop.permute.xlu0 %1587
        %v1589 = vrot.slane %v1588, 7
        %v1590 = vsel %vm355, %v1589, %v1588
        %v1592 = vadd.f32 %v1582, %v1590
        %v1594 = vlaneseq
        %v1595 = vshrl.u32 %v1594, 7
        %v1596 = vsub.s32 0, %v1595
        %v1597 = vrot.slane %v1592, %v1596
        %v1598 = vlaneseq
        %v1599 = vshrl.u32 %v1598, 7
        %v1600 = vsub.s32 1, %v1599
        %v1601 = vrot.slane %v1592, %v1600
        %v1602 = vlaneseq
        %v1603 = vshrl.u32 %v1602, 7
        %v1604 = vsub.s32 2, %v1603
        %v1605 = vrot.slane %v1592, %v1604
        %1606 = vrot.lane.b32.xlu0 %v1597, 46
        %v1607 = vpop.permute.xlu0 %1606
        %1608 = vrot.lane.b32.xlu0 %v1601, 46
        %v1609 = vpop.permute.xlu0 %1608
        %1610 = vrot.lane.b32.xlu0 %v1605, 46
        %v1611 = vpop.permute.xlu0 %1610
        %vm1612 = vcmask 375808
        %v1613 = vsel %vm1612, %v1607, %v1609
        %v1614 = vsel %vm1612, %v1609, %v1611
        %vm1618 = vcmask 1031168
        %v1619 = vsel %vm1618, %v1614, %v1607
        %s1620 = scalar_lea.vmem %s4, 5
        %v1621 = vld [vmem:[%s1620] ss:$8 sm:$0x3]
        %v1623 = vlaneseq
        %v1624 = vshrl.u32 %v1623, 7
        %v1625 = vsub.s32 0, %v1624
        %v1626 = vrot.slane %v1621, %v1625
        %v1627 = vlaneseq
        %v1628 = vshrl.u32 %v1627, 7
        %v1629 = vsub.s32 1, %v1628
        %v1630 = vrot.slane %v1621, %v1629
        %v1633 = vmul.f32 %v1613, %v1626
        %v1634 = vmul.f32 %v1619, %v1630
        %v1635 = vadd.f32 %v1464, %v1633
        %v1636 = vadd.f32 %v1465, %v1634
        %s1637 = sld [smem:[#allocation7 + $0x6]]
        %v1638 = vstv %s1637
        %v1639 = vmul.f32 %v1638, %v618
        %s1640 = sld [smem:[#allocation7 + $0xd]]
        %v1641 = vstv %s1640
        %v1642 = vmul.f32 %v1641, %v618
        %1644 = vrot.lane.b32.xlu0 %v1642, 112
        %v1645 = vpop.permute.xlu0 %1644
        %v1646 = vrot.slane %v1645, 1
        %v1647 = vsel %vm639, %v1645, %v1646
        %v1649 = vadd.f32 %v1639, %v1647
        %s1650 = sld [smem:[#allocation7 + $0x14]]
        %v1651 = vstv %s1650
        %v1652 = vmul.f32 %v1651, %v618
        %1654 = vrot.lane.b32.xlu0 %v1652, 96
        %v1655 = vpop.permute.xlu0 %1654
        %v1656 = vrot.slane %v1655, 1
        %v1657 = vsel %vm650, %v1655, %v1656
        %v1659 = vadd.f32 %v1649, %v1657
        %s1660 = sld [smem:[#allocation7 + $0x1b]]
        %v1661 = vstv %s1660
        %v1662 = vmul.f32 %v1661, %v620
        %1664 = vrot.lane.b32.xlu0 %v1662, 80
        %v1665 = vpop.permute.xlu0 %1664
        %v1666 = vrot.slane %v1665, 7
        %v1667 = vsel %vm661, %v1666, %v1665
        %v1669 = vadd.f32 %v1659, %v1667
        %s1670 = sld [smem:[#allocation7 + $0x22]]
        %v1671 = vstv %s1670
        %v1672 = vmul.f32 %v1671, %v622
        %1674 = vrot.lane.b32.xlu0 %v1672, 64
        %v1675 = vpop.permute.xlu0 %1674
        %v1676 = vrot.slane %v1675, 7
        %v1677 = vsel %vm672, %v1676, %v1675
        %v1679 = vadd.f32 %v1669, %v1677
        %s1680 = sld [smem:[#allocation7 + $0x29]]
        %v1681 = vstv %s1680
        %v1682 = vmul.f32 %v1681, %v622
        %1684 = vrot.lane.b32.xlu0 %v1682, 48
        %v1685 = vpop.permute.xlu0 %1684
        %v1686 = vrot.slane %v1685, 7
        %v1687 = vsel %vm683, %v1686, %v1685
        %v1689 = vadd.f32 %v1679, %v1687
        %s1690 = sld [smem:[#allocation7 + $0x30]]
        %v1691 = vstv %s1690
        %v1692 = vmul.f32 %v1691, %v622
        %1694 = vrot.lane.b32.xlu0 %v1692, 32
        %v1695 = vpop.permute.xlu0 %1694
        %v1696 = vrot.slane %v1695, 7
        %v1697 = vsel %vm355, %v1696, %v1695
        %v1699 = vadd.f32 %v1689, %v1697
        %s1700 = sld [smem:[#allocation7 + $0x37]]
        %v1701 = vstv %s1700
        %v1702 = vmul.f32 %v1701, %v624
        %v1703 = vadd.f32 %v1699, %v1702
        %s1704 = sld [smem:[#allocation7 + $0x3e]]
        %v1705 = vstv %s1704
        %v1706 = vmul.f32 %v1705, %v624
        %1708 = vrot.lane.b32.xlu0 %v1706, 112
        %v1709 = vpop.permute.xlu0 %1708
        %v1710 = vrot.slane %v1709, 1
        %v1711 = vsel %vm639, %v1709, %v1710
        %v1713 = vadd.f32 %v1703, %v1711
        %s1714 = sld [smem:[#allocation7 + $0x45]]
        %v1715 = vstv %s1714
        %v1716 = vmul.f32 %v1715, %v624
        %1718 = vrot.lane.b32.xlu0 %v1716, 96
        %v1719 = vpop.permute.xlu0 %1718
        %v1720 = vrot.slane %v1719, 1
        %v1721 = vsel %vm650, %v1719, %v1720
        %v1723 = vadd.f32 %v1713, %v1721
        %s1724 = sld [smem:[#allocation7 + $0x4c]]
        %v1725 = vstv %s1724
        %v1726 = vmul.f32 %v1725, %v626
        %1728 = vrot.lane.b32.xlu0 %v1726, 80
        %v1729 = vpop.permute.xlu0 %1728
        %v1730 = vrot.slane %v1729, 7
        %v1731 = vsel %vm661, %v1730, %v1729
        %v1733 = vadd.f32 %v1723, %v1731
        %s1734 = sld [smem:[#allocation7 + $0x53]]
        %v1735 = vstv %s1734
        %v1736 = vmul.f32 %v1735, %v628
        %1738 = vrot.lane.b32.xlu0 %v1736, 64
        %v1739 = vpop.permute.xlu0 %1738
        %v1740 = vrot.slane %v1739, 7
        %v1741 = vsel %vm672, %v1740, %v1739
        %v1743 = vadd.f32 %v1733, %v1741
        %s1744 = sld [smem:[#allocation7 + $0x5a]]
        %v1745 = vstv %s1744
        %v1746 = vmul.f32 %v1745, %v628
        %1748 = vrot.lane.b32.xlu0 %v1746, 48
        %v1749 = vpop.permute.xlu0 %1748
        %v1750 = vrot.slane %v1749, 7
        %v1751 = vsel %vm683, %v1750, %v1749
        %v1753 = vadd.f32 %v1743, %v1751
        %s1754 = sld [smem:[#allocation7 + $0x61]]
        %v1755 = vstv %s1754
        %v1756 = vmul.f32 %v1755, %v628
        %1758 = vrot.lane.b32.xlu0 %v1756, 32
        %v1759 = vpop.permute.xlu0 %1758
        %v1760 = vrot.slane %v1759, 7
        %v1761 = vsel %vm355, %v1760, %v1759
        %v1763 = vadd.f32 %v1753, %v1761
        %v1765 = vlaneseq
        %v1766 = vshrl.u32 %v1765, 7
        %v1767 = vsub.s32 0, %v1766
        %v1768 = vrot.slane %v1763, %v1767
        %v1769 = vlaneseq
        %v1770 = vshrl.u32 %v1769, 7
        %v1771 = vsub.s32 1, %v1770
        %v1772 = vrot.slane %v1763, %v1771
        %v1773 = vlaneseq
        %v1774 = vshrl.u32 %v1773, 7
        %v1775 = vsub.s32 2, %v1774
        %v1776 = vrot.slane %v1763, %v1775
        %1777 = vrot.lane.b32.xlu0 %v1768, 45
        %v1778 = vpop.permute.xlu0 %1777
        %1779 = vrot.lane.b32.xlu0 %v1772, 45
        %v1780 = vpop.permute.xlu0 %1779
        %1781 = vrot.lane.b32.xlu0 %v1776, 45
        %v1782 = vpop.permute.xlu0 %1781
        %vm1783 = vcmask 367616
        %v1784 = vsel %vm1783, %v1778, %v1780
        %v1785 = vsel %vm1783, %v1780, %v1782
        %vm1789 = vcmask 1022976
        %v1790 = vsel %vm1789, %v1785, %v1778
        %s1791 = scalar_lea.vmem %s4, 6
        %v1792 = vld [vmem:[%s1791] ss:$8 sm:$0x3]
        %v1794 = vlaneseq
        %v1795 = vshrl.u32 %v1794, 7
        %v1796 = vsub.s32 0, %v1795
        %v1797 = vrot.slane %v1792, %v1796
        %v1798 = vlaneseq
        %v1799 = vshrl.u32 %v1798, 7
        %v1800 = vsub.s32 1, %v1799
        %v1801 = vrot.slane %v1792, %v1800
        %v1804 = vmul.f32 %v1784, %v1797
        %v1805 = vmul.f32 %v1790, %v1801
        %v1806 = vadd.f32 %v1635, %v1804
        %v1807 = vadd.f32 %v1636, %v1805
        %v1808 = vxor.u32 %v1806, 2147483648
        %v1809 = vxor.u32 %v1807, 2147483648
        %v1810 = vmul.f32 %v1808, 1.442695
        %v1811 = vpow.pop %v1810
        %v1812 = vmul.f32 %v1809, 1.442695
        %v1813 = vpow.pop %v1812
        %v1814 = vadd.f32 %v1811, 1.0
        %v1815 = vadd.f32 %v1813, 1.0
        %v1816 = vrcp.pop %v1814
        %v1817 = vmul.f32 1.0, %v1816
        %v1818 = vrcp.pop %v1815
        %v1819 = vmul.f32 1.0, %v1818
        %v1820 = vld [vmem:[%s256] sm:$0xff]
        %v1821 = vld [vmem:[%s256 + $0x8] sm:$0xff]
        %v1822 = vld [vmem:[%s256 + $0x10] sm:$0xff]
        %v1823 = vld [vmem:[%s256 + $0x18] sm:$0xff]
        %v1824 = vld [vmem:[%s256 + $0x20] sm:$0xff]
        %v1825 = vld [vmem:[%s256 + $0x28] sm:$0xff]
        %v1826 = vld [vmem:[%s256 + $0x30] sm:$0xff]
        %v1827 = vld [vmem:[%s256 + $0x38] sm:$0xff]
        %v1828 = vlaneseq
        %v1829 = vshrl.u32 %v1828, 7
        %v1830 = vsub.s32 0, %v1829
        %v1831 = vrot.slane %v1817, %v1830
        %v1832 = vlaneseq
        %v1833 = vshrl.u32 %v1832, 7
        %v1834 = vsub.s32 0, %v1833
        %v1835 = vrot.slane %v1819, %v1834
        %v1836 = vmul.f32 %v1820, %v1831
        %v1837 = vmul.f32 %v1821, %v1835
        %v1838 = vmul.f32 %v1822, %v1831
        %v1839 = vmul.f32 %v1823, %v1835
        %v1840 = vmul.f32 %v1824, %v1831
        %v1841 = vmul.f32 %v1825, %v1835
        %v1842 = vmul.f32 %v1826, %v1831
        %v1843 = vmul.f32 %v1827, %v1835
        %1844 = vst [vmem:[%s256] sm:$0xff] %v1836
        %1845 = vst [vmem:[%s256 + $0x8] sm:$0xff] %v1837
        %1846 = vst [vmem:[%s256 + $0x10] sm:$0xff] %v1838
        %1847 = vst [vmem:[%s256 + $0x18] sm:$0xff] %v1839
        %1848 = vst [vmem:[%s256 + $0x20] sm:$0xff] %v1840
        %1849 = vst [vmem:[%s256 + $0x28] sm:$0xff] %v1841
        %1850 = vst [vmem:[%s256 + $0x30] sm:$0xff] %v1842
        %1851 = vst [vmem:[%s256 + $0x38] sm:$0xff] %v1843
        %s1852 = sand.u32 %s141, 1
        %s1853 = scalar_lea.sflag [#allocation5], %s1852
        %s1854 = sand.u32 %s141, 1
        %s1855 = smul.addr %s1854, 64
        %s1856 = scalar_lea.vmem [#allocation8], %s1855
        // Predicated region
        $region49: #{tpu_custom_call.1} parent=39 // pred_check
          %p1857 = pneg %p151
        $region50: #{tpu_custom_call.1} parent=39 // pred_check_branch
          %1859 = sbr.rel (%p1857) target = $region52
        $region51: #{tpu_custom_call.1} parent=39 // pred_region
          %s1861 = ssub.s32 1024, 1024
          %1862 = vsyncadd %s1853, %s1861
          %s1863 = smul.addr %s23, 8
          %s1864 = smul.addr %s1863, 128
          %s1865 = scalar_lea.hbm %s5, %s1864
          %s1866 = sshll.u32 %s1856, 4
          %s1867 = int_to_ptr.vmem [resolvable:$true] %s1866
          %1872 = dma.vmem_to_hbm [thread:$0]  %s1867, 1024, %s1865, %s1853, 256, 256, 16
        $region52: #{tpu_custom_call.1} parent=39 // pred_fallthru
          _
      $region40: #{tpu_custom_call.1} parent=5 // pred_fallthru
        _
      %p1873 = scmp.le.s32.totalorder 2, %s18
      // Predicated region
      $region53: #{tpu_custom_call.1} parent=5 // pred_check
        %p1874 = pneg %p1873
      $region54: #{tpu_custom_call.1} parent=5 // pred_check_branch
        %1876 = sbr.rel (%p1874) target = $region56
      $region55: #{tpu_custom_call.1} parent=5 // pred_region
        %s1877 = ssub.s32 %s18, 2
        // Predicated region
        $region57: #{tpu_custom_call.1} parent=55 // pred_check
          %p1878 = pneg %p157
        $region58: #{tpu_custom_call.1} parent=55 // pred_check_branch
          %1880 = sbr.rel (%p1878) target = $region60
        $region59: #{tpu_custom_call.1} parent=55 // pred_region
          %s1881 = sand.u32 %s142, 1
          %s1882 = scalar_lea.sflag [#allocation5], %s1881
          %s1883 = sand.u32 %s142, 1
          %s1884 = smul.addr %s1883, 64
          %s1885 = scalar_lea.vmem [#allocation8], %s1884
          %1886 = dma.done %s1882, 1024
        $region60: #{tpu_custom_call.1} parent=55 // pred_fallthru
          _
      $region56: #{tpu_custom_call.1} parent=5 // pred_fallthru
        _
    $region6: #{tpu_custom_call.1} parent=1 // loop_footer
      %s22 = sadd.s32 1, %s18
    $region7: #{tpu_custom_call.1} parent=1 // loop_footer_branch
      %17 = sbr.rel target = $region3
    $region8: #{tpu_custom_call.1} parent=1 // loop_exit
      _
    %1887 = vsyncpa [#allocation4], 1
    %s1888 = scalar_lea.sflag [#allocation4], 1
    %1889 = vsyncpa %s1888, 1
    %1890 = vsyncpa [#allocation5], 1
    %s1891 = scalar_lea.sflag [#allocation5], 1
    %1892 = vsyncpa %s1891, 1
    %1893 = vsyncpa [#allocation6], 1
    %s1894 = scalar_lea.sflag [#allocation6], 1
    %1895 = vsyncpa %s1894, 1

</llo_original>
